<compile_context>
chip_gen: v6e
topology: v6e:2x2x1
jax: 0.10.0
libtpu: 0.0.40
codegen_flags: <defaults>
</compile_context>

<pallas_src>
import functools
import math

import jax
import jax.numpy as jnp
from jax.experimental import pallas as pl
from jax.experimental.pallas import tpu as pltpu

_BIG = 3.0e38  # "masked out" sentinel for the iterative k-smallest selection


def _pick_tm(n):
    """Query-row tile: cap at 128 (full MXU rows, v7x 64 MiB VMEM-safe), keep
    >= 2 grid steps so both v7x TensorCores get work."""
    for tm in (128, 64, 32, 16, 8):
        if n % tm == 0 and n // tm >= 2:
            return tm
    if n % 8 == 0:
        return min(n, 128)
    # TODO(synk): pad N (e.g. 27*27=729 tokens) to a multiple of 8 with masked
    # rows/columns; not needed for the shapes exercised here.
    raise ValueError("token count N must be a multiple of 8")


def _vmem_limit_bytes(n, c, tm):
    resident = 2 * (c * n * 2)            # (C, N) bf16 x^T (double-buffer worst case)
    per_tile = tm * c * 2 + n * 4 + 6 * tm * 4
    work = 6 * tm * n * 4                 # (TM, N) f32 intermediates
    est = resident + 2 * per_tile + work + (1 << 20)
    # Stay >= the 32 MiB scoped default, cap at a v7x-safe 64 MiB.
    return int(min(max(est, 32 * 1024 * 1024), 64 * 1024 * 1024))


def _density_kernel(x_tile_ref, xt_ref, sq_row_ref, sq_col_ref,
                    dens_ref, rowmax_ref, *, k, inv_c):
    """Per TM-row tile: kNN local density + per-row max squared distance."""
    # bf16 operands, f32 accumulate on the MXU; RHS already in (K, N) layout.
    cross = jax.lax.dot_general(
        x_tile_ref[...], xt_ref[...], (((1,), (0,)), ((), ())),
        preferred_element_type=jnp.float32)                    # (TM, N)
    d2 = jnp.maximum(sq_col_ref[...] + sq_row_ref[...] - 2.0 * cross, 0.0)
    rowmax_ref[...] = jnp.max(d2, axis=-1, keepdims=True)

    # k smallest squared distances (self distance ~0 included), iterative
    # masked min on d2 (monotone with d, so same k-set as the reference).
    # TODO(synk): exact distance ties are masked together here; the reference
    # counts duplicated values separately (only differs for duplicate tokens).
    work = d2
    acc = jnp.zeros((d2.shape[0], 1), jnp.float32)
    for _ in range(k):
        m = jnp.min(work, axis=-1, keepdims=True)
        acc = acc + m
        work = jnp.where(work <= m, jnp.float32(_BIG), work)

    # density = exp(-mean_k (d/sqrt(C))^2) = exp(-acc / (k*C)); exp is on EUP.
    # TODO(synk): reference adds torch.rand(...)*1e-6 tie-break noise; omitted.
    dens_ref[...] = jnp.exp(acc * jnp.float32(-inv_c / k))


def _score_kernel(x_tile_ref, xt_ref, sq_row_ref, sq_col_ref,
                  dens_row_ref, dens_col_ref, dmax_ref, score_ref,
                  *, inv_sqrt_c):
    """DPC score: distance to nearest higher-density token, times density.
    Recomputes the (TM, N) distance tile on the MXU instead of reading it."""
    cross = jax.lax.dot_general(
        x_tile_ref[...], xt_ref[...], (((1,), (0,)), ((), ())),
        preferred_element_type=jnp.float32)                    # (TM, N)
    d2 = jnp.maximum(sq_col_ref[...] + sq_row_ref[...] - 2.0 * cross, 0.0)
    d = jnp.sqrt(d2) * jnp.float32(inv_sqrt_c)                 # == cdist/sqrt(C)

    dmax = dmax_ref[0]                                         # SMEM scalar
    higher = dens_row_ref[...] > dens_col_ref[...]             # (TM, N)
    dist_ind = jnp.min(jnp.where(higher, d, dmax), axis=-1, keepdims=True)
    score_ref[...] = dist_ind * dens_col_ref[...]


def _density_pass(x_bf, xt_bf, sq_row, sq_col, k, tm):
    n, c = x_bf.shape
    kern = functools.partial(_density_kernel, k=k, inv_c=1.0 / c)
    return pl.pallas_call(
        kern,
        out_shape=(jax.ShapeDtypeStruct((n, 1), jnp.float32),
                   jax.ShapeDtypeStruct((n, 1), jnp.float32)),
        grid_spec=pltpu.PrefetchScalarGridSpec(
            num_scalar_prefetch=0,
            grid=(n // tm,),
            in_specs=[pl.BlockSpec((tm, c), lambda i: (i, 0)),
                      pl.BlockSpec((c, n), lambda i: (0, 0)),   # resident x^T
                      pl.BlockSpec((1, n), lambda i: (0, 0)),   # resident |x_j|^2
                      pl.BlockSpec((tm, 1), lambda i: (i, 0))],
            out_specs=[pl.BlockSpec((tm, 1), lambda i: (i, 0)),
                       pl.BlockSpec((tm, 1), lambda i: (i, 0))]),
        compiler_params=pltpu.CompilerParams(
            dimension_semantics=("parallel",),
            vmem_limit_bytes=_vmem_limit_bytes(n, c, tm)),
    )(x_bf, xt_bf, sq_row, sq_col)


def _score_pass(x_bf, xt_bf, sq_row, sq_col, dens_row, dens_col, dmax, tm):
    n, c = x_bf.shape
    kern = functools.partial(_score_kernel, inv_sqrt_c=1.0 / math.sqrt(c))
    score = pl.pallas_call(
        kern,
        out_shape=jax.ShapeDtypeStruct((n, 1), jnp.float32),
        grid_spec=pltpu.PrefetchScalarGridSpec(
            num_scalar_prefetch=0,
            grid=(n // tm,),
            in_specs=[pl.BlockSpec((tm, c), lambda i: (i, 0)),
                      pl.BlockSpec((c, n), lambda i: (0, 0)),
                      pl.BlockSpec((1, n), lambda i: (0, 0)),
                      pl.BlockSpec((tm, 1), lambda i: (i, 0)),
                      pl.BlockSpec((1, n), lambda i: (0, 0)),   # density row
                      pl.BlockSpec((tm, 1), lambda i: (i, 0)),  # density col
                      pl.BlockSpec(memory_space=pltpu.MemorySpace.SMEM)],
            out_specs=pl.BlockSpec((tm, 1), lambda i: (i, 0))),
        compiler_params=pltpu.CompilerParams(
            dimension_semantics=("parallel",),
            vmem_limit_bytes=_vmem_limit_bytes(n, c, tm)),
    )(x_bf, xt_bf, sq_row, sq_col, dens_row, dens_col, dmax)
    return score.reshape(n)


@functools.partial(jax.jit, static_argnums=(1, 2))
def _fastv_cluster_jit(patch_features, num_clusters, k):
    _, n, c = patch_features.shape
    tm = _pick_tm(n)

    # bf16 operands for the MXU fast path; x^T precomputed once in (K, N)
    # layout so no in-kernel relayout.  Norm corrections stay f32.
    x_bf = patch_features[0].astype(jnp.bfloat16)               # (N, C)
    xt_bf = x_bf.T                                              # (C, N)
    sq = jnp.sum(x_bf.astype(jnp.float32) ** 2, axis=-1)        # (N,)
    sq_row = sq.reshape(1, n)
    sq_col = sq.reshape(n, 1)

    dens_col, rowmax = _density_pass(x_bf, xt_bf, sq_row, sq_col, k, tm)
    # Global max distance (scaled), folded from pass-1 per-row maxima.
    dmax = (jnp.sqrt(jnp.max(rowmax)) / math.sqrt(c)).reshape(1).astype(jnp.float32)
    dens_row = dens_col.reshape(1, n)

    score = _score_pass(x_bf, xt_bf, sq_row, sq_col, dens_row, dens_col,
                        dmax, tm)
    _, index_down = jax.lax.top_k(score, num_clusters)          # cluster centers
    return index_down


def fastv_patch_cluster(patch_features, num_clusters, tokens_per_cluster,
                        filter_clusters=False):
    """JAX/Pallas equivalent of FastVPatchCluster.forward (filter_clusters=False)."""
    if filter_clusters:
        # TODO(synk): filter_clusters branch needs torch.pinverse, scipy
        # chi2.ppf and data-dependent nonzero()/unique(); no clean static-shape
        # Pallas equivalent.
        raise NotImplementedError("filter_clusters=True path not implemented")
    if tokens_per_cluster != 1:
        raise AssertionError("reference asserts tokens_per_cluster == 1")

    b, _, _ = patch_features.shape
    assert b == 1, "reference forward asserts a single image (len(index_down) == 1)"

    k_self = 5
    k = min(3, max(num_clusters // 2, 1)) if k_self > num_clusters else k_self
    return _fastv_cluster_jit(patch_features, num_clusters, k)


if __name__ == "__main__":
    key = jax.random.PRNGKey(0)
    B, N, C = 1, 256, 64          # small (B, N, C) token slab; TM=128 -> 2 grid steps
    num_clusters, tokens_per_cluster = 16, 1
    patch_features = jax.random.normal(key, (B, N, C), dtype=jnp.float32)

    index_down = fastv_patch_cluster(patch_features, num_clusters,
                                     tokens_per_cluster, filter_clusters=False)
    jax.block_until_ready(index_down)
    assert index_down.shape == (num_clusters,)
    print("KERNEL_OK")
</pallas_src>

<mosaic_0001>
module attributes {stable_mosaic.version = 11 : i64} {
  func.func @_density_kernel(%arg0: i32, %arg1: memref<128x64xbf16, #tpu.memory_space<vmem>>, %arg2: memref<64x256xbf16, #tpu.memory_space<vmem>>, %arg3: memref<1x256xf32, #tpu.memory_space<vmem>>, %arg4: memref<128x1xf32, #tpu.memory_space<vmem>>, %arg5: memref<128x1xf32, #tpu.memory_space<vmem>>, %arg6: memref<128x1xf32, #tpu.memory_space<vmem>>) attributes {dimension_semantics = [#tpu.dimension_semantics<parallel>], iteration_bounds = array<i64: 2>, scalar_prefetch = 0 : i64, scratch_operands = 0 : i64, tpu.core_type = #tpu.core_type<tc>, window_params = [{transform_indices = @transform_0, window_bounds = array<i64: 128, 64>}, {pipeline_mode = #tpu.pipeline_mode<synchronous>, transform_indices = @transform_1, window_bounds = array<i64: 64, 256>}, {pipeline_mode = #tpu.pipeline_mode<synchronous>, transform_indices = @transform_2, window_bounds = array<i64: 1, 256>}, {transform_indices = @transform_3, window_bounds = array<i64: 128, 1>}, {transform_indices = @transform_4, window_bounds = array<i64: 128, 1>}, {transform_indices = @transform_5, window_bounds = array<i64: 128, 1>}]} {
    %c0 = arith.constant 0 : index
    %c0_0 = arith.constant 0 : index
    %0 = vector.load %arg1[%c0, %c0_0] : memref<128x64xbf16, #tpu.memory_space<vmem>>, vector<128x64xbf16>
    %c0_1 = arith.constant 0 : index
    %c0_2 = arith.constant 0 : index
    %1 = vector.load %arg2[%c0_1, %c0_2] : memref<64x256xbf16, #tpu.memory_space<vmem>>, vector<64x256xbf16>
    %cst = arith.constant dense<0.000000e+00> : vector<128x256xf32>
    %2 = tpu.matmul %0, %1, %cst {dimension_numbers = #tpu.dot_dimension_numbers<[1], [0], [0], [1], [0, 0, 1, 1], [], []>} : vector<128x64xbf16>, vector<64x256xbf16>, vector<128x256xf32> -> vector<128x256xf32>
    %c0_3 = arith.constant 0 : index
    %c0_4 = arith.constant 0 : index
    %3 = vector.load %arg4[%c0_3, %c0_4] : memref<128x1xf32, #tpu.memory_space<vmem>>, vector<128x1xf32>
    %c0_5 = arith.constant 0 : index
    %c0_6 = arith.constant 0 : index
    %4 = vector.load %arg3[%c0_5, %c0_6] : memref<1x256xf32, #tpu.memory_space<vmem>>, vector<1x256xf32>
    %5 = vector.broadcast %3 : vector<128x1xf32> to vector<128x256xf32>
    %6 = vector.broadcast %4 : vector<1x256xf32> to vector<128x256xf32>
    %7 = arith.addf %5, %6 : vector<128x256xf32>
    %cst_7 = arith.constant 2.000000e+00 : f32
    %8 = vector.broadcast %cst_7 : f32 to vector<128x256xf32>
    %9 = arith.mulf %8, %2 : vector<128x256xf32>
    %10 = arith.subf %7, %9 : vector<128x256xf32>
    %cst_8 = arith.constant 0.000000e+00 : f32
    %11 = vector.broadcast %cst_8 : f32 to vector<128x256xf32>
    %12 = arith.maximumf %10, %11 : vector<128x256xf32>
    %cst_9 = arith.constant dense<0xFF800000> : vector<128xf32>
    %13 = vector.multi_reduction <maximumf>, %12, %cst_9 [1] : vector<128x256xf32> to vector<128xf32>
    %14 = vector.shape_cast %13 : vector<128xf32> to vector<128x1xf32>
    %c0_10 = arith.constant 0 : index
    %c0_11 = arith.constant 0 : index
    %15 = vector.load %arg6[%c0_10, %c0_11] : memref<128x1xf32, #tpu.memory_space<vmem>>, vector<128x1xf32>
    tpu.vector_store %arg6[%c0_10, %c0_11], %14 {strides = array<i32>} : memref<128x1xf32, #tpu.memory_space<vmem>>, vector<128x1xf32>,
    %cst_12 = arith.constant 0.000000e+00 : f32
    %16 = vector.broadcast %cst_12 : f32 to vector<128x1xf32>
    %cst_13 = arith.constant dense<0x7F800000> : vector<128xf32>
    %17 = vector.multi_reduction <minimumf>, %12, %cst_13 [1] : vector<128x256xf32> to vector<128xf32>
    %18 = vector.shape_cast %17 : vector<128xf32> to vector<128x1xf32>
    %19 = arith.addf %16, %18 : vector<128x1xf32>
    %20 = vector.broadcast %18 : vector<128x1xf32> to vector<128x256xf32>
    %21 = arith.cmpf ole, %12, %20 : vector<128x256xf32>
    %cst_14 = arith.constant 3.000000e+38 : f32
    %22 = vector.broadcast %cst_14 : f32 to vector<128x256xf32>
    %23 = arith.select %21, %22, %12 : vector<128x256xi1>, vector<128x256xf32>
    %cst_15 = arith.constant dense<0x7F800000> : vector<128xf32>
    %24 = vector.multi_reduction <minimumf>, %23, %cst_15 [1] : vector<128x256xf32> to vector<128xf32>
    %25 = vector.shape_cast %24 : vector<128xf32> to vector<128x1xf32>
    %26 = arith.addf %19, %25 : vector<128x1xf32>
    %27 = vector.broadcast %25 : vector<128x1xf32> to vector<128x256xf32>
    %28 = arith.cmpf ole, %23, %27 : vector<128x256xf32>
    %cst_16 = arith.constant 3.000000e+38 : f32
    %29 = vector.broadcast %cst_16 : f32 to vector<128x256xf32>
    %30 = arith.select %28, %29, %23 : vector<128x256xi1>, vector<128x256xf32>
    %cst_17 = arith.constant dense<0x7F800000> : vector<128xf32>
    %31 = vector.multi_reduction <minimumf>, %30, %cst_17 [1] : vector<128x256xf32> to vector<128xf32>
    %32 = vector.shape_cast %31 : vector<128xf32> to vector<128x1xf32>
    %33 = arith.addf %26, %32 : vector<128x1xf32>
    %34 = vector.broadcast %32 : vector<128x1xf32> to vector<128x256xf32>
    %35 = arith.cmpf ole, %30, %34 : vector<128x256xf32>
    %cst_18 = arith.constant 3.000000e+38 : f32
    %36 = vector.broadcast %cst_18 : f32 to vector<128x256xf32>
    %37 = arith.select %35, %36, %30 : vector<128x256xi1>, vector<128x256xf32>
    %cst_19 = arith.constant dense<0x7F800000> : vector<128xf32>
    %38 = vector.multi_reduction <minimumf>, %37, %cst_19 [1] : vector<128x256xf32> to vector<128xf32>
    %39 = vector.shape_cast %38 : vector<128xf32> to vector<128x1xf32>
    %40 = arith.addf %33, %39 : vector<128x1xf32>
    %41 = vector.broadcast %39 : vector<128x1xf32> to vector<128x256xf32>
    %42 = arith.cmpf ole, %37, %41 : vector<128x256xf32>
    %cst_20 = arith.constant 3.000000e+38 : f32
    %43 = vector.broadcast %cst_20 : f32 to vector<128x256xf32>
    %44 = arith.select %42, %43, %37 : vector<128x256xi1>, vector<128x256xf32>
    %cst_21 = arith.constant dense<0x7F800000> : vector<128xf32>
    %45 = vector.multi_reduction <minimumf>, %44, %cst_21 [1] : vector<128x256xf32> to vector<128xf32>
    %46 = vector.shape_cast %45 : vector<128xf32> to vector<128x1xf32>
    %47 = arith.addf %40, %46 : vector<128x1xf32>
    %cst_22 = arith.constant -3.125000e-03 : f32
    %48 = vector.broadcast %cst_22 : f32 to vector<128x1xf32>
    %49 = arith.mulf %47, %48 : vector<128x1xf32>
    %50 = math.exp %49 : vector<128x1xf32>
    %c0_23 = arith.constant 0 : index
    %c0_24 = arith.constant 0 : index
    %51 = vector.load %arg5[%c0_23, %c0_24] : memref<128x1xf32, #tpu.memory_space<vmem>>, vector<128x1xf32>
    tpu.vector_store %arg5[%c0_23, %c0_24], %50 {strides = array<i32>} : memref<128x1xf32, #tpu.memory_space<vmem>>, vector<128x1xf32>,
    return
  }
  func.func @transform_0(%arg0: i32) -> (i32, i32) {
    %c0_i32 = arith.constant 0 : i32
    %c0_i32_0 = arith.constant 0 : i32
    return %arg0, %c0_i32 : i32, i32
  }
  func.func @transform_1(%arg0: i32) -> (i32, i32) {
    %c0_i32 = arith.constant 0 : i32
    %c0_i32_0 = arith.constant 0 : i32
    %c0_i32_1 = arith.constant 0 : i32
    return %c0_i32, %c0_i32_0 : i32, i32
  }
  func.func @transform_2(%arg0: i32) -> (i32, i32) {
    %c0_i32 = arith.constant 0 : i32
    %c0_i32_0 = arith.constant 0 : i32
    %c0_i32_1 = arith.constant 0 : i32
    return %c0_i32, %c0_i32_0 : i32, i32
  }
  func.func @transform_3(%arg0: i32) -> (i32, i32) {
    %c0_i32 = arith.constant 0 : i32
    %c0_i32_0 = arith.constant 0 : i32
    return %arg0, %c0_i32 : i32, i32
  }
  func.func @transform_4(%arg0: i32) -> (i32, i32) {
    %c0_i32 = arith.constant 0 : i32
    %c0_i32_0 = arith.constant 0 : i32
    return %arg0, %c0_i32 : i32, i32
  }
  func.func @transform_5(%arg0: i32) -> (i32, i32) {
    %c0_i32 = arith.constant 0 : i32
    %c0_i32_0 = arith.constant 0 : i32
    return %arg0, %c0_i32 : i32, i32
  }
}

module attributes {stable_mosaic.version = 11 : i64} {
  func.func @_score_kernel(%arg0: i32, %arg1: memref<128x64xbf16, #tpu.memory_space<vmem>>, %arg2: memref<64x256xbf16, #tpu.memory_space<vmem>>, %arg3: memref<1x256xf32, #tpu.memory_space<vmem>>, %arg4: memref<128x1xf32, #tpu.memory_space<vmem>>, %arg5: memref<1x256xf32, #tpu.memory_space<vmem>>, %arg6: memref<128x1xf32, #tpu.memory_space<vmem>>, %arg7: memref<1xf32, #tpu.memory_space<smem>>, %arg8: memref<128x1xf32, #tpu.memory_space<vmem>>) attributes {dimension_semantics = [#tpu.dimension_semantics<parallel>], iteration_bounds = array<i64: 2>, scalar_prefetch = 0 : i64, scratch_operands = 0 : i64, tpu.core_type = #tpu.core_type<tc>, window_params = [{transform_indices = @transform_0, window_bounds = array<i64: 128, 64>}, {pipeline_mode = #tpu.pipeline_mode<synchronous>, transform_indices = @transform_1, window_bounds = array<i64: 64, 256>}, {pipeline_mode = #tpu.pipeline_mode<synchronous>, transform_indices = @transform_2, window_bounds = array<i64: 1, 256>}, {transform_indices = @transform_3, window_bounds = array<i64: 128, 1>}, {pipeline_mode = #tpu.pipeline_mode<synchronous>, transform_indices = @transform_4, window_bounds = array<i64: 1, 256>}, {transform_indices = @transform_5, window_bounds = array<i64: 128, 1>}, {transform_indices = @transform_6, window_bounds = array<i64: 1>}, {transform_indices = @transform_7, window_bounds = array<i64: 128, 1>}]} {
    %c0 = arith.constant 0 : index
    %c0_0 = arith.constant 0 : index
    %0 = vector.load %arg1[%c0, %c0_0] : memref<128x64xbf16, #tpu.memory_space<vmem>>, vector<128x64xbf16>
    %c0_1 = arith.constant 0 : index
    %c0_2 = arith.constant 0 : index
    %1 = vector.load %arg2[%c0_1, %c0_2] : memref<64x256xbf16, #tpu.memory_space<vmem>>, vector<64x256xbf16>
    %cst = arith.constant dense<0.000000e+00> : vector<128x256xf32>
    %2 = tpu.matmul %0, %1, %cst {dimension_numbers = #tpu.dot_dimension_numbers<[1], [0], [0], [1], [0, 0, 1, 1], [], []>} : vector<128x64xbf16>, vector<64x256xbf16>, vector<128x256xf32> -> vector<128x256xf32>
    %c0_3 = arith.constant 0 : index
    %c0_4 = arith.constant 0 : index
    %3 = vector.load %arg4[%c0_3, %c0_4] : memref<128x1xf32, #tpu.memory_space<vmem>>, vector<128x1xf32>
    %c0_5 = arith.constant 0 : index
    %c0_6 = arith.constant 0 : index
    %4 = vector.load %arg3[%c0_5, %c0_6] : memref<1x256xf32, #tpu.memory_space<vmem>>, vector<1x256xf32>
    %5 = vector.broadcast %3 : vector<128x1xf32> to vector<128x256xf32>
    %6 = vector.broadcast %4 : vector<1x256xf32> to vector<128x256xf32>
    %7 = arith.addf %5, %6 : vector<128x256xf32>
    %cst_7 = arith.constant 2.000000e+00 : f32
    %8 = vector.broadcast %cst_7 : f32 to vector<128x256xf32>
    %9 = arith.mulf %8, %2 : vector<128x256xf32>
    %10 = arith.subf %7, %9 : vector<128x256xf32>
    %cst_8 = arith.constant 0.000000e+00 : f32
    %11 = vector.broadcast %cst_8 : f32 to vector<128x256xf32>
    %12 = arith.maximumf %10, %11 : vector<128x256xf32>
    %13 = math.sqrt %12 : vector<128x256xf32>
    %cst_9 = arith.constant 1.250000e-01 : f32
    %14 = vector.broadcast %cst_9 : f32 to vector<128x256xf32>
    %15 = arith.mulf %13, %14 : vector<128x256xf32>
    %c0_10 = arith.constant 0 : index
    %16 = memref.load %arg7[%c0_10] : memref<1xf32, #tpu.memory_space<smem>>
    %c0_11 = arith.constant 0 : index
    %c0_12 = arith.constant 0 : index
    %17 = vector.load %arg5[%c0_11, %c0_12] : memref<1x256xf32, #tpu.memory_space<vmem>>, vector<1x256xf32>
    %c0_13 = arith.constant 0 : index
    %c0_14 = arith.constant 0 : index
    %18 = vector.load %arg6[%c0_13, %c0_14] : memref<128x1xf32, #tpu.memory_space<vmem>>, vector<128x1xf32>
    %19 = vector.broadcast %17 : vector<1x256xf32> to vector<128x256xf32>
    %20 = vector.broadcast %18 : vector<128x1xf32> to vector<128x256xf32>
    %21 = arith.cmpf ogt, %19, %20 : vector<128x256xf32>
    %22 = vector.broadcast %16 : f32 to vector<128x256xf32>
    %23 = arith.select %21, %15, %22 : vector<128x256xi1>, vector<128x256xf32>
    %cst_15 = arith.constant dense<0x7F800000> : vector<128xf32>
    %24 = vector.multi_reduction <minimumf>, %23, %cst_15 [1] : vector<128x256xf32> to vector<128xf32>
    %25 = vector.shape_cast %24 : vector<128xf32> to vector<128x1xf32>
    %c0_16 = arith.constant 0 : index
    %c0_17 = arith.constant 0 : index
    %26 = vector.load %arg6[%c0_16, %c0_17] : memref<128x1xf32, #tpu.memory_space<vmem>>, vector<128x1xf32>
    %27 = arith.mulf %25, %26 : vector<128x1xf32>
    %c0_18 = arith.constant 0 : index
    %c0_19 = arith.constant 0 : index
    %28 = vector.load %arg8[%c0_18, %c0_19] : memref<128x1xf32, #tpu.memory_space<vmem>>, vector<128x1xf32>
    tpu.vector_store %arg8[%c0_18, %c0_19], %27 {strides = array<i32>} : memref<128x1xf32, #tpu.memory_space<vmem>>, vector<128x1xf32>,
    return
  }
  func.func @transform_0(%arg0: i32) -> (i32, i32) {
    %c0_i32 = arith.constant 0 : i32
    %c0_i32_0 = arith.constant 0 : i32
    return %arg0, %c0_i32 : i32, i32
  }
  func.func @transform_1(%arg0: i32) -> (i32, i32) {
    %c0_i32 = arith.constant 0 : i32
    %c0_i32_0 = arith.constant 0 : i32
    %c0_i32_1 = arith.constant 0 : i32
    return %c0_i32, %c0_i32_0 : i32, i32
  }
  func.func @transform_2(%arg0: i32) -> (i32, i32) {
    %c0_i32 = arith.constant 0 : i32
    %c0_i32_0 = arith.constant 0 : i32
    %c0_i32_1 = arith.constant 0 : i32
    return %c0_i32, %c0_i32_0 : i32, i32
  }
  func.func @transform_3(%arg0: i32) -> (i32, i32) {
    %c0_i32 = arith.constant 0 : i32
    %c0_i32_0 = arith.constant 0 : i32
    return %arg0, %c0_i32 : i32, i32
  }
  func.func @transform_4(%arg0: i32) -> (i32, i32) {
    %c0_i32 = arith.constant 0 : i32
    %c0_i32_0 = arith.constant 0 : i32
    %c0_i32_1 = arith.constant 0 : i32
    return %c0_i32, %c0_i32_0 : i32, i32
  }
  func.func @transform_5(%arg0: i32) -> (i32, i32) {
    %c0_i32 = arith.constant 0 : i32
    %c0_i32_0 = arith.constant 0 : i32
    return %arg0, %c0_i32 : i32, i32
  }
  func.func @transform_6(%arg0: i32) -> i32 {
    %c0_i32 = arith.constant 0 : i32
    %c0_i32_0 = arith.constant 0 : i32
    return %c0_i32 : i32
  }
  func.func @transform_7(%arg0: i32) -> (i32, i32) {
    %c0_i32 = arith.constant 0 : i32
    %c0_i32_0 = arith.constant 0 : i32
    return %arg0, %c0_i32 : i32, i32
  }
}

</mosaic_0001>

<llo_original>
// kernel: _fastv_cluster_jit.3
$region0: #{_fastv_cluster_jit.3}
  #allocation0 [shape = 'u32[]', space=smem, size = 0x4, offset = 0x4, fixed_abs, tag = 'smem constant byte address 0x4 - core index']
  #allocation1 [shape = 'u32[144,128]{1,0:T(1,128)}', space=vmem, size = 0x12000, scoped, tag = 'internal scratch']
  #allocation2 [shape = 'f32[1]{0:T(128)S(6)}', space=smem, size = 0x200, scoped, tag = 'scoped memory for _fastv_cluster_jit.3']
  %s0 = inlined_call_operand.vmem [shape: bf16[256,64], index: 0, kind: input, shape index: {}]
  %s1 = inlined_call_operand.vmem [shape: bf16[64,256], index: 1, kind: input, shape index: {}]
  %s2 = inlined_call_operand.vmem [shape: f32[1,256], index: 2, kind: input, shape index: {}]
  %s3 = inlined_call_operand.vmem [shape: f32[256,1], index: 3, kind: input, shape index: {}]
  %s4 = inlined_call_operand.vmem [shape: f32[1,256], index: 4, kind: input, shape index: {}]
  %s5 = inlined_call_operand.vmem [shape: f32[256,1], index: 5, kind: input, shape index: {}]
  %s6 = inlined_call_operand.<no memory space> [shape: f32[1], index: 6, kind: input, shape index: {}]
  %s7 = inlined_call_operand.vmem [shape: f32[256,1], index: 7, kind: output, shape index: {}]
  %s8 = sld [smem:[#allocation0]]
  $region61: #{_fastv_cluster_jit.3} parent=0
    _
  %s10 = ssub.s32 1, %s8
  %s11 = scalar_select 0, %s10, %s8
  %12 = sst [smem:[#allocation2]] %s6
  loop: start=0, step=1, limit=4
  $region2: #{_fastv_cluster_jit.3} parent=0 // loop_pre_header
    _
  $region3: #{_fastv_cluster_jit.3} parent=0 // loop_header
    %s14 = sphi 0, %s18
    %p15 = scmp.ge.s32.totalorder %s14, 4
    %s24 = sphi 0, %s26
    %s27 = sphi 0, %s24
    %s28 = sphi 0, %s27
    %s44 = sphi 0, %s28
    %s48 = sphi 0, %s48
    %s50 = sphi 0, %s48
    %s51 = sphi 0, %s50
    %s65 = sphi 0, %s51
    %s69 = sphi 0, %s69
    %s71 = sphi 0, %s69
    %s72 = sphi 0, %s71
    %s86 = sphi 0, %s72
    %s92 = sphi 0, %s94
    %s95 = sphi 0, %s92
    %s96 = sphi 0, %s95
    %s112 = sphi 0, %s96
    %s116 = sphi 0, %s116
    %s118 = sphi 0, %s116
    %s119 = sphi 0, %s118
    %s133 = sphi 0, %s119
    %s139 = sphi 0, %s141
    %s142 = sphi 0, %s139
    %s143 = sphi 0, %s142
    %s159 = sphi 0, %s143
    %s163 = sphi 0, %s163
    %s165 = sphi 0, %s163
    %s166 = sphi 0, %s165
    %s180 = sphi 0, %s166
    %s186 = sphi 0, %s188
    %s189 = sphi 0, %s186
    %s190 = sphi 0, %s189
    %s206 = sphi 0, %s190
  $region4: #{_fastv_cluster_jit.3} parent=0 // loop_header_branch
    %17 = sbr.rel (%p15) target = $region8
  $region5: #{_fastv_cluster_jit.3} parent=0 // loop_body
    %s19 = ssub.s32 %s14, 1
    %s20 = ssub.s32 %s14, 2
    %s21 = sadd.s32 %s14, 1
    %s22 = ssub.s32 %s14, %s21
    %p23 = scmp.eq.s32.totalorder %s22, 0
    %s25 = sadd.s32 %s24, 1
    %s26 = scalar_select %p23, %s24, %s25
    %p29 = pneg %p23
    %p30 = scmp.eq.s32.totalorder %s14, 1
    %p31 = por %p29, %p30
    %p32 = scmp.ne.s32.totalorder %s24, %s27
    %p33 = scmp.eq.s32.totalorder %s14, 0
    %p34 = por %p32, %p33
    %p35 = scmp.ne.s32.totalorder %s24, %s27
    %p36 = scmp.eq.s32.totalorder %s19, 1
    %p37 = por %p35, %p36
    %p38 = scmp.ne.s32.totalorder %s27, %s28
    %p39 = scmp.eq.s32.totalorder %s19, 0
    %p40 = por %p38, %p39
    %p41 = scmp.ne.s32.totalorder %s27, %s28
    %p42 = scmp.eq.s32.totalorder %s20, 1
    %p43 = por %p41, %p42
    %p45 = scmp.ne.s32.totalorder %s28, %s44
    %p46 = scmp.eq.s32.totalorder %s20, 0
    %p47 = por %p45, %p46
    %s49 = sadd.s32 %s48, 1
    %p52 = scmp.eq.s32.totalorder %s14, 1
    %p53 = scmp.ne.s32.totalorder %s48, %s50
    %p54 = scmp.eq.s32.totalorder %s14, 0
    %p55 = por %p53, %p54
    %p56 = scmp.ne.s32.totalorder %s48, %s50
    %p57 = scmp.eq.s32.totalorder %s19, 1
    %p58 = por %p56, %p57
    %p59 = scmp.ne.s32.totalorder %s50, %s51
    %p60 = scmp.eq.s32.totalorder %s19, 0
    %p61 = por %p59, %p60
    %p62 = scmp.ne.s32.totalorder %s50, %s51
    %p63 = scmp.eq.s32.totalorder %s20, 1
    %p64 = por %p62, %p63
    %p66 = scmp.ne.s32.totalorder %s51, %s65
    %p67 = scmp.eq.s32.totalorder %s20, 0
    %p68 = por %p66, %p67
    %s70 = sadd.s32 %s69, 1
    %p73 = scmp.eq.s32.totalorder %s14, 1
    %p74 = scmp.ne.s32.totalorder %s69, %s71
    %p75 = scmp.eq.s32.totalorder %s14, 0
    %p76 = por %p74, %p75
    %p77 = scmp.ne.s32.totalorder %s69, %s71
    %p78 = scmp.eq.s32.totalorder %s19, 1
    %p79 = por %p77, %p78
    %p80 = scmp.ne.s32.totalorder %s71, %s72
    %p81 = scmp.eq.s32.totalorder %s19, 0
    %p82 = por %p80, %p81
    %p83 = scmp.ne.s32.totalorder %s71, %s72
    %p84 = scmp.eq.s32.totalorder %s20, 1
    %p85 = por %p83, %p84
    %p87 = scmp.ne.s32.totalorder %s72, %s86
    %p88 = scmp.eq.s32.totalorder %s20, 0
    %p89 = por %p87, %p88
    %s90 = ssub.s32 %s14, %s21
    %p91 = scmp.eq.s32.totalorder %s90, 0
    %s93 = sadd.s32 %s92, 1
    %s94 = scalar_select %p91, %s92, %s93
    %p97 = pneg %p91
    %p98 = scmp.eq.s32.totalorder %s14, 1
    %p99 = por %p97, %p98
    %p100 = scmp.ne.s32.totalorder %s92, %s95
    %p101 = scmp.eq.s32.totalorder %s14, 0
    %p102 = por %p100, %p101
    %p103 = scmp.ne.s32.totalorder %s92, %s95
    %p104 = scmp.eq.s32.totalorder %s19, 1
    %p105 = por %p103, %p104
    %p106 = scmp.ne.s32.totalorder %s95, %s96
    %p107 = scmp.eq.s32.totalorder %s19, 0
    %p108 = por %p106, %p107
    %p109 = scmp.ne.s32.totalorder %s95, %s96
    %p110 = scmp.eq.s32.totalorder %s20, 1
    %p111 = por %p109, %p110
    %p113 = scmp.ne.s32.totalorder %s96, %s112
    %p114 = scmp.eq.s32.totalorder %s20, 0
    %p115 = por %p113, %p114
    %s117 = sadd.s32 %s116, 1
    %p120 = scmp.eq.s32.totalorder %s14, 1
    %p121 = scmp.ne.s32.totalorder %s116, %s118
    %p122 = scmp.eq.s32.totalorder %s14, 0
    %p123 = por %p121, %p122
    %p124 = scmp.ne.s32.totalorder %s116, %s118
    %p125 = scmp.eq.s32.totalorder %s19, 1
    %p126 = por %p124, %p125
    %p127 = scmp.ne.s32.totalorder %s118, %s119
    %p128 = scmp.eq.s32.totalorder %s19, 0
    %p129 = por %p127, %p128
    %p130 = scmp.ne.s32.totalorder %s118, %s119
    %p131 = scmp.eq.s32.totalorder %s20, 1
    %p132 = por %p130, %p131
    %p134 = scmp.ne.s32.totalorder %s119, %s133
    %p135 = scmp.eq.s32.totalorder %s20, 0
    %p136 = por %p134, %p135
    %s137 = ssub.s32 %s14, %s21
    %p138 = scmp.eq.s32.totalorder %s137, 0
    %s140 = sadd.s32 %s139, 1
    %s141 = scalar_select %p138, %s139, %s140
    %p144 = pneg %p138
    %p145 = scmp.eq.s32.totalorder %s14, 1
    %p146 = por %p144, %p145
    %p147 = scmp.ne.s32.totalorder %s139, %s142
    %p148 = scmp.eq.s32.totalorder %s14, 0
    %p149 = por %p147, %p148
    %p150 = scmp.ne.s32.totalorder %s139, %s142
    %p151 = scmp.eq.s32.totalorder %s19, 1
    %p152 = por %p150, %p151
    %p153 = scmp.ne.s32.totalorder %s142, %s143
    %p154 = scmp.eq.s32.totalorder %s19, 0
    %p155 = por %p153, %p154
    %p156 = scmp.ne.s32.totalorder %s142, %s143
    %p157 = scmp.eq.s32.totalorder %s20, 1
    %p158 = por %p156, %p157
    %p160 = scmp.ne.s32.totalorder %s143, %s159
    %p161 = scmp.eq.s32.totalorder %s20, 0
    %p162 = por %p160, %p161
    %s164 = sadd.s32 %s163, 1
    %p167 = scmp.eq.s32.totalorder %s14, 1
    %p168 = scmp.ne.s32.totalorder %s163, %s165
    %p169 = scmp.eq.s32.totalorder %s14, 0
    %p170 = por %p168, %p169
    %p171 = scmp.ne.s32.totalorder %s163, %s165
    %p172 = scmp.eq.s32.totalorder %s19, 1
    %p173 = por %p171, %p172
    %p174 = scmp.ne.s32.totalorder %s165, %s166
    %p175 = scmp.eq.s32.totalorder %s19, 0
    %p176 = por %p174, %p175
    %p177 = scmp.ne.s32.totalorder %s165, %s166
    %p178 = scmp.eq.s32.totalorder %s20, 1
    %p179 = por %p177, %p178
    %p181 = scmp.ne.s32.totalorder %s166, %s180
    %p182 = scmp.eq.s32.totalorder %s20, 0
    %p183 = por %p181, %p182
    %s184 = ssub.s32 %s14, %s21
    %p185 = scmp.eq.s32.totalorder %s184, 0
    %s187 = sadd.s32 %s186, 1
    %s188 = scalar_select %p185, %s186, %s187
    %p191 = pneg %p185
    %p192 = scmp.eq.s32.totalorder %s14, 1
    %p193 = por %p191, %p192
    %p194 = scmp.ne.s32.totalorder %s186, %s189
    %p195 = scmp.eq.s32.totalorder %s14, 0
    %p196 = por %p194, %p195
    %p197 = scmp.ne.s32.totalorder %s186, %s189
    %p198 = scmp.eq.s32.totalorder %s19, 1
    %p199 = por %p197, %p198
    %p200 = scmp.ne.s32.totalorder %s189, %s190
    %p201 = scmp.eq.s32.totalorder %s19, 0
    %p202 = por %p200, %p201
    %p203 = scmp.ne.s32.totalorder %s189, %s190
    %p204 = scmp.eq.s32.totalorder %s20, 1
    %p205 = por %p203, %p204
    %p207 = scmp.ne.s32.totalorder %s190, %s206
    %p208 = scmp.eq.s32.totalorder %s20, 0
    %p209 = por %p207, %p208
    %p210 = scmp.le.s32.totalorder 1, %s14
    %p211 = scmp.lt.s32.totalorder %s14, 3
    %p212 = pnand %p210, %p211
    %p213 = pneg %p212
    // Predicated region
    $region9: #{_fastv_cluster_jit.3} parent=5 // pred_check
      _
    $region10: #{_fastv_cluster_jit.3} parent=5 // pred_check_branch
      %215 = sbr.rel (%p212) target = $region12
    $region11: #{_fastv_cluster_jit.3} parent=5 // pred_region
      %s216 = ssub.s32 %s14, 1
      // Predicated region
      $region13: #{_fastv_cluster_jit.3} parent=11 // pred_check
        %p217 = pneg %p61
      $region14: #{_fastv_cluster_jit.3} parent=11 // pred_check_branch
        %219 = sbr.rel (%p217) target = $region16
      $region15: #{_fastv_cluster_jit.3} parent=11 // pred_region
        _
      $region16: #{_fastv_cluster_jit.3} parent=11 // pred_fallthru
        _
      // Predicated region
      $region17: #{_fastv_cluster_jit.3} parent=11 // pred_check
        %p220 = pneg %p82
      $region18: #{_fastv_cluster_jit.3} parent=11 // pred_check_branch
        %222 = sbr.rel (%p220) target = $region20
      $region19: #{_fastv_cluster_jit.3} parent=11 // pred_region
        _
      $region20: #{_fastv_cluster_jit.3} parent=11 // pred_fallthru
        _
      // Predicated region
      $region21: #{_fastv_cluster_jit.3} parent=11 // pred_check
        %p223 = pneg %p129
      $region22: #{_fastv_cluster_jit.3} parent=11 // pred_check_branch
        %225 = sbr.rel (%p223) target = $region24
      $region23: #{_fastv_cluster_jit.3} parent=11 // pred_region
        _
      $region24: #{_fastv_cluster_jit.3} parent=11 // pred_fallthru
        _
      // Predicated region
      $region25: #{_fastv_cluster_jit.3} parent=11 // pred_check
        %p226 = pneg %p176
      $region26: #{_fastv_cluster_jit.3} parent=11 // pred_check_branch
        %228 = sbr.rel (%p226) target = $region28
      $region27: #{_fastv_cluster_jit.3} parent=11 // pred_region
        _
      $region28: #{_fastv_cluster_jit.3} parent=11 // pred_fallthru
        _
    $region12: #{_fastv_cluster_jit.3} parent=5 // pred_fallthru
      _
    %p229 = scmp.lt.s32.totalorder %s14, 2
    // Predicated region
    $region29: #{_fastv_cluster_jit.3} parent=5 // pred_check
      %p230 = pneg %p229
    $region30: #{_fastv_cluster_jit.3} parent=5 // pred_check_branch
      %232 = sbr.rel (%p230) target = $region32
    $region31: #{_fastv_cluster_jit.3} parent=5 // pred_region
      // Predicated region
      $region33: #{_fastv_cluster_jit.3} parent=31 // pred_check
        %p233 = pneg %p34
      $region34: #{_fastv_cluster_jit.3} parent=31 // pred_check_branch
        %235 = sbr.rel (%p233) target = $region36
      $region35: #{_fastv_cluster_jit.3} parent=31 // pred_region
        %s236 = smul.u32 16, %s14
        %p237 = scmp.lt.s32.totalorder %s236, 31
        %s238 = scalar_select %p237, %s236, 31
        %s239 = smul.addr %s238, 4
        %s240 = scalar_lea.vmem %s0, %s239
        %s241 = smul.u32 16, %s14
      $region36: #{_fastv_cluster_jit.3} parent=31 // pred_fallthru
        _
      // Predicated region
      $region37: #{_fastv_cluster_jit.3} parent=31 // pred_check
        %p242 = pneg %p102
      $region38: #{_fastv_cluster_jit.3} parent=31 // pred_check_branch
        %244 = sbr.rel (%p242) target = $region40
      $region39: #{_fastv_cluster_jit.3} parent=31 // pred_region
        %s245 = smul.u32 16, %s14
        %p246 = scmp.lt.s32.totalorder %s245, 31
        %s247 = scalar_select %p246, %s245, 31
        %s248 = smul.addr %s247, 8
        %s249 = scalar_lea.vmem %s3, %s248
        %s250 = smul.u32 16, %s14
      $region40: #{_fastv_cluster_jit.3} parent=31 // pred_fallthru
        _
      // Predicated region
      $region41: #{_fastv_cluster_jit.3} parent=31 // pred_check
        %p251 = pneg %p149
      $region42: #{_fastv_cluster_jit.3} parent=31 // pred_check_branch
        %253 = sbr.rel (%p251) target = $region44
      $region43: #{_fastv_cluster_jit.3} parent=31 // pred_region
        %s254 = smul.u32 16, %s14
        %p255 = scmp.lt.s32.totalorder %s254, 31
        %s256 = scalar_select %p255, %s254, 31
        %s257 = smul.addr %s256, 8
        %s258 = scalar_lea.vmem %s5, %s257
        %s259 = smul.u32 16, %s14
      $region44: #{_fastv_cluster_jit.3} parent=31 // pred_fallthru
        _
    $region32: #{_fastv_cluster_jit.3} parent=5 // pred_fallthru
      _
    %p260 = scmp.le.s32.totalorder 1, %s14
    %p261 = scmp.lt.s32.totalorder %s14, 3
    %p262 = pnand %p260, %p261
    %p263 = pneg %p262
    // Predicated region
    $region45: #{_fastv_cluster_jit.3} parent=5 // pred_check
      _
    $region46: #{_fastv_cluster_jit.3} parent=5 // pred_check_branch
      %265 = sbr.rel (%p262) target = $region48
    $region47: #{_fastv_cluster_jit.3} parent=5 // pred_region
      %s266 = ssub.s32 %s14, 1
      %s267 = smul.u32 16, %s19
      %p268 = scmp.lt.s32.totalorder %s267, 31
      %s269 = scalar_select %p268, %s267, 31
      %s270 = smul.addr %s269, 4
      %s271 = scalar_lea.vmem %s0, %s270
      %p272 = pneg %p40
      %p273 = pneg %p37
      %p274 = pneg %p61
      %p275 = pneg %p58
      %p276 = pneg %p82
      %p277 = pneg %p79
      %s278 = smul.u32 16, %s19
      %p279 = scmp.lt.s32.totalorder %s278, 31
      %s280 = scalar_select %p279, %s278, 31
      %s281 = smul.addr %s280, 8
      %s282 = scalar_lea.vmem %s3, %s281
      %p283 = pneg %p108
      %p284 = pneg %p105
      %p285 = pneg %p129
      %p286 = pneg %p126
      %s287 = smul.u32 16, %s19
      %p288 = scmp.lt.s32.totalorder %s287, 31
      %s289 = scalar_select %p288, %s287, 31
      %s290 = smul.addr %s289, 8
      %s291 = scalar_lea.vmem %s5, %s290
      %p292 = pneg %p155
      %p293 = pneg %p152
      %p294 = pneg %p176
      %p295 = pneg %p173
      %p296 = pneg %p202
      %p297 = pneg %p199
      %s298 = smul.u32 16, %s19
      %p299 = scmp.lt.s32.totalorder %s298, 31
      %s300 = scalar_select %p299, %s298, 31
      %s301 = smul.addr %s300, 8
      %s302 = scalar_lea.vmem %s7, %s301
      %s303 = smul.u32 16, %s19
      %p304 = scmp.lt.s32.totalorder %s303, 31
      %s305 = scalar_select %p304, %s303, 31
      %s306 = smul.addr %s305, 4
      %s307 = scalar_lea.vmem %s0, %s306
      %s308 = smul.u32 16, %s19
      %s309 = smul.u32 16, %s19
      %p310 = scmp.lt.s32.totalorder %s309, 31
      %s311 = scalar_select %p310, %s309, 31
      %s312 = smul.addr %s311, 8
      %s313 = scalar_lea.vmem %s3, %s312
      %s314 = smul.u32 16, %s19
      %s315 = smul.u32 16, %s19
      %p316 = scmp.lt.s32.totalorder %s315, 31
      %s317 = scalar_select %p316, %s315, 31
      %s318 = smul.addr %s317, 8
      %s319 = scalar_lea.vmem %s5, %s318
      %s320 = smul.u32 16, %s19
      %s321 = smul.u32 16, %s19
      %p322 = scmp.lt.s32.totalorder %s321, 31
      %s323 = scalar_select %p322, %s321, 31
      %s324 = smul.addr %s323, 8
      %s325 = scalar_lea.vmem %s7, %s324
      %s326 = smul.u32 16, %s19
      %v328 = vld [vmem:[%s307] sm:$0xf]
      %v329 = vld [vmem:[%s307 + $0x4] sm:$0xf]
      %v330 = vld [vmem:[%s307 + $0x8] sm:$0xf]
      %v331 = vld [vmem:[%s307 + $0xc] sm:$0xf]
      %v332 = vld [vmem:[%s307 + $0x10] sm:$0xf]
      %v333 = vld [vmem:[%s307 + $0x14] sm:$0xf]
      %v334 = vld [vmem:[%s307 + $0x18] sm:$0xf]
      %v335 = vld [vmem:[%s307 + $0x1c] sm:$0xf]
      %v336 = vld [vmem:[%s307 + $0x20] sm:$0xf]
      %v337 = vld [vmem:[%s307 + $0x24] sm:$0xf]
      %v338 = vld [vmem:[%s307 + $0x28] sm:$0xf]
      %v339 = vld [vmem:[%s307 + $0x2c] sm:$0xf]
      %v340 = vld [vmem:[%s307 + $0x30] sm:$0xf]
      %v341 = vld [vmem:[%s307 + $0x34] sm:$0xf]
      %v342 = vld [vmem:[%s307 + $0x38] sm:$0xf]
      %v343 = vld [vmem:[%s307 + $0x3c] sm:$0xf]
      %v344 = vld [vmem:[%s1] sm:$0xff]
      %v345 = vld [vmem:[%s1 + $0x8] sm:$0xff]
      %v346 = vld [vmem:[%s1 + $0x10] sm:$0xff]
      %v347 = vld [vmem:[%s1 + $0x18] sm:$0xff]
      %v348 = vld [vmem:[%s1 + $0x20] sm:$0xff]
      %v349 = vld [vmem:[%s1 + $0x28] sm:$0xff]
      %v350 = vld [vmem:[%s1 + $0x30] sm:$0xff]
      %v351 = vld [vmem:[%s1 + $0x38] sm:$0xff]
      %v368 = vunpack.c.l.b16 %v328
      %v369 = vunpack.c.l.b16 %v329
      %v370 = vunpack.c.l.b16 %v330
      %v371 = vunpack.c.l.b16 %v331
      %v372 = vunpack.c.l.b16 %v332
      %v373 = vunpack.c.l.b16 %v333
      %v374 = vunpack.c.l.b16 %v334
      %v375 = vunpack.c.l.b16 %v335
      %v376 = vunpack.c.l.b16 %v336
      %v377 = vunpack.c.l.b16 %v337
      %v378 = vunpack.c.l.b16 %v338
      %v379 = vunpack.c.l.b16 %v339
      %v380 = vunpack.c.l.b16 %v340
      %v381 = vunpack.c.l.b16 %v341
      %v382 = vunpack.c.l.b16 %v342
      %v383 = vunpack.c.l.b16 %v343
      %v384 = vpack.c.b16 %v369, %v368
      %v385 = vpack.c.b16 %v371, %v370
      %v386 = vpack.c.b16 %v373, %v372
      %v387 = vpack.c.b16 %v375, %v374
      %v388 = vpack.c.b16 %v377, %v376
      %v389 = vpack.c.b16 %v379, %v378
      %v390 = vpack.c.b16 %v381, %v380
      %v391 = vpack.c.b16 %v383, %v382
      %v400 = vunpack.c.l.b16 %v344
      %v401 = vunpack.c.h.b16 %v344
      %v402 = vunpack.c.l.b16 %v345
      %v403 = vunpack.c.h.b16 %v345
      %v404 = vunpack.c.l.b16 %v346
      %v405 = vunpack.c.h.b16 %v346
      %v406 = vunpack.c.l.b16 %v347
      %v407 = vunpack.c.h.b16 %v347
      %v408 = vunpack.c.l.b16 %v348
      %v409 = vunpack.c.h.b16 %v348
      %v410 = vunpack.c.l.b16 %v349
      %v411 = vunpack.c.h.b16 %v349
      %v412 = vunpack.c.l.b16 %v350
      %v413 = vunpack.c.h.b16 %v350
      %v414 = vunpack.c.l.b16 %v351
      %v415 = vunpack.c.h.b16 %v351
      %v416 = vpack.c.b16 %v402, %v400
      %v417 = vpack.c.b16 %v403, %v401
      %v418 = vpack.c.b16 %v406, %v404
      %v419 = vpack.c.b16 %v407, %v405
      %v420 = vpack.c.b16 %v410, %v408
      %v421 = vpack.c.b16 %v411, %v409
      %v422 = vpack.c.b16 %v414, %v412
      %v423 = vpack.c.b16 %v415, %v413
      %vm432 = vcmask 523264
      %v434 = vsel %vm432, %v384, 0
      %v437 = vsel %vm432, %v385, 0
      %v440 = vsel %vm432, %v386, 0
      %v443 = vsel %vm432, %v387, 0
      %v446 = vsel %vm432, %v388, 0
      %v449 = vsel %vm432, %v389, 0
      %v452 = vsel %vm432, %v390, 0
      %v455 = vsel %vm432, %v391, 0
      %457 = vmatprep.subr.bf16.mxu0 0
      %458 = vmatpush1.bf16.msra.mxu0 0
      %459 = vmatprep.subr.bf16.mxu0 0
      %460 = vmatpush1.bf16.msra.mxu0 0
      %461 = vmatprep.subr.bf16.mxu0 0
      %462 = vmatpush1.bf16.msra.mxu0 0
      %463 = vmatprep.subr.bf16.mxu0 0
      %464 = vmatpush1.bf16.msra.mxu0 0
      %465 = vmatprep.subr.bf16.mxu0 %v423
      %466 = vmatpush1.bf16.msra.mxu0 %v422
      %467 = vmatprep.subr.bf16.mxu0 %v421
      %468 = vmatpush1.bf16.msra.mxu0 %v420
      %469 = vmatprep.subr.bf16.mxu0 %v419
      %470 = vmatpush1.bf16.msra.mxu0 %v418
      %471 = vmatprep.subr.bf16.mxu0 %v417
      %472 = vmatpush1.bf16.msra.mxu0 %v416
      %473 = vmatprep.subr.bf16.mxu0 0
      %474 = vmatpush2.bf16.msra.mxu0 0
      %475 = vmatprep.subr.bf16.mxu0 0
      %476 = vmatpush2.bf16.msra.mxu0 0
      %477 = vmatprep.subr.bf16.mxu0 0
      %478 = vmatpush2.bf16.msra.mxu0 0
      %479 = vmatprep.subr.bf16.mxu0 0
      %480 = vmatpush2.bf16.msra.mxu0 0
      %481 = vmatprep.subr.bf16.mxu0 0
      %482 = vmatpush2.bf16.msra.mxu0 0
      %483 = vmatprep.subr.bf16.mxu0 0
      %484 = vmatpush2.bf16.msra.mxu0 0
      %485 = vmatprep.subr.bf16.mxu0 0
      %486 = vmatpush2.bf16.msra.mxu0 0
      %487 = vmatprep.subr.bf16.mxu0 0
      %488 = vmatpush2.bf16.msra.mxu0 0
      %489 = vmatprep.mubr.bf16.mxu0 0
      %490 = vmatmul.mubr.bf16.gmra.mxu0 %v434
      %v491 = vpop.f32.mrf.mxu0
      %v492 = vadd.f32 0.0, %v491
      %v493 = vpop.f32.mrf.mxu0
      %v494 = vadd.f32 0.0, %v493
      %v495 = vpop.f32.mrf.mxu0
      %v496 = vadd.f32 0.0, %v495
      %v497 = vpop.f32.mrf.mxu0
      %v498 = vadd.f32 0.0, %v497
      %499 = vmatprep.mubr.bf16.mxu0 0
      %500 = vmatmul.mubr.bf16.gmra.mxu0 %v437
      %v501 = vpop.f32.mrf.mxu0
      %v502 = vadd.f32 0.0, %v501
      %v503 = vpop.f32.mrf.mxu0
      %v504 = vadd.f32 0.0, %v503
      %v505 = vpop.f32.mrf.mxu0
      %v506 = vadd.f32 0.0, %v505
      %v507 = vpop.f32.mrf.mxu0
      %v508 = vadd.f32 0.0, %v507
      %509 = vmatprep.mubr.bf16.mxu0 0
      %510 = vmatmul.mubr.bf16.gmra.mxu0 %v440
      %v511 = vpop.f32.mrf.mxu0
      %v512 = vadd.f32 0.0, %v511
      %v513 = vpop.f32.mrf.mxu0
      %v514 = vadd.f32 0.0, %v513
      %v515 = vpop.f32.mrf.mxu0
      %v516 = vadd.f32 0.0, %v515
      %v517 = vpop.f32.mrf.mxu0
      %v518 = vadd.f32 0.0, %v517
      %519 = vmatprep.mubr.bf16.mxu0 0
      %520 = vmatmul.mubr.bf16.gmra.mxu0 %v443
      %v521 = vpop.f32.mrf.mxu0
      %v522 = vadd.f32 0.0, %v521
      %v523 = vpop.f32.mrf.mxu0
      %v524 = vadd.f32 0.0, %v523
      %v525 = vpop.f32.mrf.mxu0
      %v526 = vadd.f32 0.0, %v525
      %v527 = vpop.f32.mrf.mxu0
      %v528 = vadd.f32 0.0, %v527
      %529 = vmatprep.mubr.bf16.mxu0 0
      %530 = vmatmul.mubr.bf16.gmra.mxu0 %v446
      %v531 = vpop.f32.mrf.mxu0
      %v532 = vadd.f32 0.0, %v531
      %v533 = vpop.f32.mrf.mxu0
      %v534 = vadd.f32 0.0, %v533
      %v535 = vpop.f32.mrf.mxu0
      %v536 = vadd.f32 0.0, %v535
      %v537 = vpop.f32.mrf.mxu0
      %v538 = vadd.f32 0.0, %v537
      %539 = vmatprep.mubr.bf16.mxu0 0
      %540 = vmatmul.mubr.bf16.gmra.mxu0 %v449
      %v541 = vpop.f32.mrf.mxu0
      %v542 = vadd.f32 0.0, %v541
      %v543 = vpop.f32.mrf.mxu0
      %v544 = vadd.f32 0.0, %v543
      %v545 = vpop.f32.mrf.mxu0
      %v546 = vadd.f32 0.0, %v545
      %v547 = vpop.f32.mrf.mxu0
      %v548 = vadd.f32 0.0, %v547
      %549 = vmatprep.mubr.bf16.mxu0 0
      %550 = vmatmul.mubr.bf16.gmra.mxu0 %v452
      %v551 = vpop.f32.mrf.mxu0
      %v552 = vadd.f32 0.0, %v551
      %v553 = vpop.f32.mrf.mxu0
      %v554 = vadd.f32 0.0, %v553
      %v555 = vpop.f32.mrf.mxu0
      %v556 = vadd.f32 0.0, %v555
      %v557 = vpop.f32.mrf.mxu0
      %v558 = vadd.f32 0.0, %v557
      %559 = vmatprep.mubr.bf16.mxu0 0
      %560 = vmatmul.mubr.bf16.gmra.mxu0 %v455
      %v561 = vpop.f32.mrf.mxu0
      %v562 = vadd.f32 0.0, %v561
      %v563 = vpop.f32.mrf.mxu0
      %v564 = vadd.f32 0.0, %v563
      %v565 = vpop.f32.mrf.mxu0
      %v566 = vadd.f32 0.0, %v565
      %v567 = vpop.f32.mrf.mxu0
      %v568 = vadd.f32 0.0, %v567
      %569 = vdwg.mxu0
      %v570 = vld [vmem:[%s313] sm:$0xff]
      %v571 = vld [vmem:[%s313 + $0x8] sm:$0xff]
      %v572 = vld [vmem:[%s313 + $0x10] sm:$0xff]
      %v573 = vld [vmem:[%s313 + $0x18] sm:$0xff]
      %v574 = vld [vmem:[%s313 + $0x20] sm:$0xff]
      %v575 = vld [vmem:[%s313 + $0x28] sm:$0xff]
      %v576 = vld [vmem:[%s313 + $0x30] sm:$0xff]
      %v577 = vld [vmem:[%s313 + $0x38] sm:$0xff]
      %v578 = vld [vmem:[%s313 + $0x40] sm:$0xff]
      %v579 = vld [vmem:[%s313 + $0x48] sm:$0xff]
      %v580 = vld [vmem:[%s313 + $0x50] sm:$0xff]
      %v581 = vld [vmem:[%s313 + $0x58] sm:$0xff]
      %v582 = vld [vmem:[%s313 + $0x60] sm:$0xff]
      %v583 = vld [vmem:[%s313 + $0x68] sm:$0xff]
      %v584 = vld [vmem:[%s313 + $0x70] sm:$0xff]
      %v585 = vld [vmem:[%s313 + $0x78] sm:$0xff]
      %v586 = vld [vmem:[%s2] sm:$0x3]
      %588 = vset.pattern.permute.xlu0 0
      %589 = vperm.xlu0 %588, %v570
      %v590 = vpop.permute.xlu0 %589
      %593 = vset.pattern.permute.xlu0 0
      %594 = vperm.xlu0 %593, %v571
      %v595 = vpop.permute.xlu0 %594
      %598 = vset.pattern.permute.xlu0 0
      %599 = vperm.xlu0 %598, %v572
      %v600 = vpop.permute.xlu0 %599
      %603 = vset.pattern.permute.xlu0 0
      %604 = vperm.xlu0 %603, %v573
      %v605 = vpop.permute.xlu0 %604
      %608 = vset.pattern.permute.xlu0 0
      %609 = vperm.xlu0 %608, %v574
      %v610 = vpop.permute.xlu0 %609
      %613 = vset.pattern.permute.xlu0 0
      %614 = vperm.xlu0 %613, %v575
      %v615 = vpop.permute.xlu0 %614
      %618 = vset.pattern.permute.xlu0 0
      %619 = vperm.xlu0 %618, %v576
      %v620 = vpop.permute.xlu0 %619
      %623 = vset.pattern.permute.xlu0 0
      %624 = vperm.xlu0 %623, %v577
      %v625 = vpop.permute.xlu0 %624
      %628 = vset.pattern.permute.xlu0 0
      %629 = vperm.xlu0 %628, %v578
      %v630 = vpop.permute.xlu0 %629
      %633 = vset.pattern.permute.xlu0 0
      %634 = vperm.xlu0 %633, %v579
      %v635 = vpop.permute.xlu0 %634
      %638 = vset.pattern.permute.xlu0 0
      %639 = vperm.xlu0 %638, %v580
      %v640 = vpop.permute.xlu0 %639
      %643 = vset.pattern.permute.xlu0 0
      %644 = vperm.xlu0 %643, %v581
      %v645 = vpop.permute.xlu0 %644
      %648 = vset.pattern.permute.xlu0 0
      %649 = vperm.xlu0 %648, %v582
      %v650 = vpop.permute.xlu0 %649
      %653 = vset.pattern.permute.xlu0 0
      %654 = vperm.xlu0 %653, %v583
      %v655 = vpop.permute.xlu0 %654
      %658 = vset.pattern.permute.xlu0 0
      %659 = vperm.xlu0 %658, %v584
      %v660 = vpop.permute.xlu0 %659
      %663 = vset.pattern.permute.xlu0 0
      %664 = vperm.xlu0 %663, %v585
      %v665 = vpop.permute.xlu0 %664
      %v668 = vlaneseq
      %v669 = vshrl.u32 %v668, 7
      %v670 = vsub.s32 0, %v669
      %v671 = vrot.slane %v586, %v670
      %v672 = vlaneseq
      %v673 = vshrl.u32 %v672, 7
      %v674 = vsub.s32 1, %v673
      %v675 = vrot.slane %v586, %v674
      %v678 = vadd.f32 %v590, %v671
      %v679 = vadd.f32 %v590, %v675
      %v680 = vadd.f32 %v595, %v671
      %v681 = vadd.f32 %v595, %v675
      %v682 = vadd.f32 %v600, %v671
      %v683 = vadd.f32 %v600, %v675
      %v684 = vadd.f32 %v605, %v671
      %v685 = vadd.f32 %v605, %v675
      %v686 = vadd.f32 %v610, %v671
      %v687 = vadd.f32 %v610, %v675
      %v688 = vadd.f32 %v615, %v671
      %v689 = vadd.f32 %v615, %v675
      %v690 = vadd.f32 %v620, %v671
      %v691 = vadd.f32 %v620, %v675
      %v692 = vadd.f32 %v625, %v671
      %v693 = vadd.f32 %v625, %v675
      %v694 = vadd.f32 %v630, %v671
      %v695 = vadd.f32 %v630, %v675
      %v696 = vadd.f32 %v635, %v671
      %v697 = vadd.f32 %v635, %v675
      %v698 = vadd.f32 %v640, %v671
      %v699 = vadd.f32 %v640, %v675
      %v700 = vadd.f32 %v645, %v671
      %v701 = vadd.f32 %v645, %v675
      %v702 = vadd.f32 %v650, %v671
      %v703 = vadd.f32 %v650, %v675
      %v704 = vadd.f32 %v655, %v671
      %v705 = vadd.f32 %v655, %v675
      %v706 = vadd.f32 %v660, %v671
      %v707 = vadd.f32 %v660, %v675
      %v708 = vadd.f32 %v665, %v671
      %v709 = vadd.f32 %v665, %v675
      %v710 = vmul.f32 %v492, 2.0
      %v711 = vmul.f32 %v494, 2.0
      %v712 = vmul.f32 %v496, 2.0
      %v713 = vmul.f32 %v498, 2.0
      %v714 = vmul.f32 %v502, 2.0
      %v715 = vmul.f32 %v504, 2.0
      %v716 = vmul.f32 %v506, 2.0
      %v717 = vmul.f32 %v508, 2.0
      %v718 = vmul.f32 %v512, 2.0
      %v719 = vmul.f32 %v514, 2.0
      %v720 = vmul.f32 %v516, 2.0
      %v721 = vmul.f32 %v518, 2.0
      %v722 = vmul.f32 %v522, 2.0
      %v723 = vmul.f32 %v524, 2.0
      %v724 = vmul.f32 %v526, 2.0
      %v725 = vmul.f32 %v528, 2.0
      %v726 = vmul.f32 %v532, 2.0
      %v727 = vmul.f32 %v534, 2.0
      %v728 = vmul.f32 %v536, 2.0
      %v729 = vmul.f32 %v538, 2.0
      %v730 = vmul.f32 %v542, 2.0
      %v731 = vmul.f32 %v544, 2.0
      %v732 = vmul.f32 %v546, 2.0
      %v733 = vmul.f32 %v548, 2.0
      %v734 = vmul.f32 %v552, 2.0
      %v735 = vmul.f32 %v554, 2.0
      %v736 = vmul.f32 %v556, 2.0
      %v737 = vmul.f32 %v558, 2.0
      %v738 = vmul.f32 %v562, 2.0
      %v739 = vmul.f32 %v564, 2.0
      %v740 = vmul.f32 %v566, 2.0
      %v741 = vmul.f32 %v568, 2.0
      %v742 = vsub.f32 %v678, %v710
      %v743 = vsub.f32 %v679, %v711
      %v744 = vsub.f32 %v680, %v712
      %v745 = vsub.f32 %v681, %v713
      %v746 = vsub.f32 %v682, %v714
      %v747 = vsub.f32 %v683, %v715
      %v748 = vsub.f32 %v684, %v716
      %v749 = vsub.f32 %v685, %v717
      %v750 = vsub.f32 %v686, %v718
      %v751 = vsub.f32 %v687, %v719
      %v752 = vsub.f32 %v688, %v720
      %v753 = vsub.f32 %v689, %v721
      %v754 = vsub.f32 %v690, %v722
      %v755 = vsub.f32 %v691, %v723
      %v756 = vsub.f32 %v692, %v724
      %v757 = vsub.f32 %v693, %v725
      %v758 = vsub.f32 %v694, %v726
      %v759 = vsub.f32 %v695, %v727
      %v760 = vsub.f32 %v696, %v728
      %v761 = vsub.f32 %v697, %v729
      %v762 = vsub.f32 %v698, %v730
      %v763 = vsub.f32 %v699, %v731
      %v764 = vsub.f32 %v700, %v732
      %v765 = vsub.f32 %v701, %v733
      %v766 = vsub.f32 %v702, %v734
      %v767 = vsub.f32 %v703, %v735
      %v768 = vsub.f32 %v704, %v736
      %v769 = vsub.f32 %v705, %v737
      %v770 = vsub.f32 %v706, %v738
      %v771 = vsub.f32 %v707, %v739
      %v772 = vsub.f32 %v708, %v740
      %v773 = vsub.f32 %v709, %v741
      %v774 = vmax.f32 %v742, 0.0
      %v775 = vmax.f32 %v743, 0.0
      %v776 = vmax.f32 %v744, 0.0
      %v777 = vmax.f32 %v745, 0.0
      %v778 = vmax.f32 %v746, 0.0
      %v779 = vmax.f32 %v747, 0.0
      %v780 = vmax.f32 %v748, 0.0
      %v781 = vmax.f32 %v749, 0.0
      %v782 = vmax.f32 %v750, 0.0
      %v783 = vmax.f32 %v751, 0.0
      %v784 = vmax.f32 %v752, 0.0
      %v785 = vmax.f32 %v753, 0.0
      %v786 = vmax.f32 %v754, 0.0
      %v787 = vmax.f32 %v755, 0.0
      %v788 = vmax.f32 %v756, 0.0
      %v789 = vmax.f32 %v757, 0.0
      %v790 = vmax.f32 %v758, 0.0
      %v791 = vmax.f32 %v759, 0.0
      %v792 = vmax.f32 %v760, 0.0
      %v793 = vmax.f32 %v761, 0.0
      %v794 = vmax.f32 %v762, 0.0
      %v795 = vmax.f32 %v763, 0.0
      %v796 = vmax.f32 %v764, 0.0
      %v797 = vmax.f32 %v765, 0.0
      %v798 = vmax.f32 %v766, 0.0
      %v799 = vmax.f32 %v767, 0.0
      %v800 = vmax.f32 %v768, 0.0
      %v801 = vmax.f32 %v769, 0.0
      %v802 = vmax.f32 %v770, 0.0
      %v803 = vmax.f32 %v771, 0.0
      %v804 = vmax.f32 %v772, 0.0
      %v805 = vmax.f32 %v773, 0.0
      %v806 = vrsqrt.pop %v774
      %v807 = vmul.f32 %v774, %v806
      %vm808 = vcmp.eq.f32.partialorder %v774, inf
      %v809 = vsel %vm808, %v774, %v807
      %vm810 = vcmp.eq.f32.partialorder %v774, 0.0
      %v811 = vand.u32 %v774, 2147483648
      %v812 = vsel %vm810, %v811, %v809
      %v813 = vrsqrt.pop %v775
      %v814 = vmul.f32 %v775, %v813
      %vm815 = vcmp.eq.f32.partialorder %v775, inf
      %v816 = vsel %vm815, %v775, %v814
      %vm817 = vcmp.eq.f32.partialorder %v775, 0.0
      %v818 = vand.u32 %v775, 2147483648
      %v819 = vsel %vm817, %v818, %v816
      %v820 = vrsqrt.pop %v776
      %v821 = vmul.f32 %v776, %v820
      %vm822 = vcmp.eq.f32.partialorder %v776, inf
      %v823 = vsel %vm822, %v776, %v821
      %vm824 = vcmp.eq.f32.partialorder %v776, 0.0
      %v825 = vand.u32 %v776, 2147483648
      %v826 = vsel %vm824, %v825, %v823
      %v827 = vrsqrt.pop %v777
      %v828 = vmul.f32 %v777, %v827
      %vm829 = vcmp.eq.f32.partialorder %v777, inf
      %v830 = vsel %vm829, %v777, %v828
      %vm831 = vcmp.eq.f32.partialorder %v777, 0.0
      %v832 = vand.u32 %v777, 2147483648
      %v833 = vsel %vm831, %v832, %v830
      %v834 = vrsqrt.pop %v778
      %v835 = vmul.f32 %v778, %v834
      %vm836 = vcmp.eq.f32.partialorder %v778, inf
      %v837 = vsel %vm836, %v778, %v835
      %vm838 = vcmp.eq.f32.partialorder %v778, 0.0
      %v839 = vand.u32 %v778, 2147483648
      %v840 = vsel %vm838, %v839, %v837
      %v841 = vrsqrt.pop %v779
      %v842 = vmul.f32 %v779, %v841
      %vm843 = vcmp.eq.f32.partialorder %v779, inf
      %v844 = vsel %vm843, %v779, %v842
      %vm845 = vcmp.eq.f32.partialorder %v779, 0.0
      %v846 = vand.u32 %v779, 2147483648
      %v847 = vsel %vm845, %v846, %v844
      %v848 = vrsqrt.pop %v780
      %v849 = vmul.f32 %v780, %v848
      %vm850 = vcmp.eq.f32.partialorder %v780, inf
      %v851 = vsel %vm850, %v780, %v849
      %vm852 = vcmp.eq.f32.partialorder %v780, 0.0
      %v853 = vand.u32 %v780, 2147483648
      %v854 = vsel %vm852, %v853, %v851
      %v855 = vrsqrt.pop %v781
      %v856 = vmul.f32 %v781, %v855
      %vm857 = vcmp.eq.f32.partialorder %v781, inf
      %v858 = vsel %vm857, %v781, %v856
      %vm859 = vcmp.eq.f32.partialorder %v781, 0.0
      %v860 = vand.u32 %v781, 2147483648
      %v861 = vsel %vm859, %v860, %v858
      %v862 = vrsqrt.pop %v782
      %v863 = vmul.f32 %v782, %v862
      %vm864 = vcmp.eq.f32.partialorder %v782, inf
      %v865 = vsel %vm864, %v782, %v863
      %vm866 = vcmp.eq.f32.partialorder %v782, 0.0
      %v867 = vand.u32 %v782, 2147483648
      %v868 = vsel %vm866, %v867, %v865
      %v869 = vrsqrt.pop %v783
      %v870 = vmul.f32 %v783, %v869
      %vm871 = vcmp.eq.f32.partialorder %v783, inf
      %v872 = vsel %vm871, %v783, %v870
      %vm873 = vcmp.eq.f32.partialorder %v783, 0.0
      %v874 = vand.u32 %v783, 2147483648
      %v875 = vsel %vm873, %v874, %v872
      %v876 = vrsqrt.pop %v784
      %v877 = vmul.f32 %v784, %v876
      %vm878 = vcmp.eq.f32.partialorder %v784, inf
      %v879 = vsel %vm878, %v784, %v877
      %vm880 = vcmp.eq.f32.partialorder %v784, 0.0
      %v881 = vand.u32 %v784, 2147483648
      %v882 = vsel %vm880, %v881, %v879
      %v883 = vrsqrt.pop %v785
      %v884 = vmul.f32 %v785, %v883
      %vm885 = vcmp.eq.f32.partialorder %v785, inf
      %v886 = vsel %vm885, %v785, %v884
      %vm887 = vcmp.eq.f32.partialorder %v785, 0.0
      %v888 = vand.u32 %v785, 2147483648
      %v889 = vsel %vm887, %v888, %v886
      %v890 = vrsqrt.pop %v786
      %v891 = vmul.f32 %v786, %v890
      %vm892 = vcmp.eq.f32.partialorder %v786, inf
      %v893 = vsel %vm892, %v786, %v891
      %vm894 = vcmp.eq.f32.partialorder %v786, 0.0
      %v895 = vand.u32 %v786, 2147483648
      %v896 = vsel %vm894, %v895, %v893
      %v897 = vrsqrt.pop %v787
      %v898 = vmul.f32 %v787, %v897
      %vm899 = vcmp.eq.f32.partialorder %v787, inf
      %v900 = vsel %vm899, %v787, %v898
      %vm901 = vcmp.eq.f32.partialorder %v787, 0.0
      %v902 = vand.u32 %v787, 2147483648
      %v903 = vsel %vm901, %v902, %v900
      %v904 = vrsqrt.pop %v788
      %v905 = vmul.f32 %v788, %v904
      %vm906 = vcmp.eq.f32.partialorder %v788, inf
      %v907 = vsel %vm906, %v788, %v905
      %vm908 = vcmp.eq.f32.partialorder %v788, 0.0
      %v909 = vand.u32 %v788, 2147483648
      %v910 = vsel %vm908, %v909, %v907
      %v911 = vrsqrt.pop %v789
      %v912 = vmul.f32 %v789, %v911
      %vm913 = vcmp.eq.f32.partialorder %v789, inf
      %v914 = vsel %vm913, %v789, %v912
      %vm915 = vcmp.eq.f32.partialorder %v789, 0.0
      %v916 = vand.u32 %v789, 2147483648
      %v917 = vsel %vm915, %v916, %v914
      %v918 = vrsqrt.pop %v790
      %v919 = vmul.f32 %v790, %v918
      %vm920 = vcmp.eq.f32.partialorder %v790, inf
      %v921 = vsel %vm920, %v790, %v919
      %vm922 = vcmp.eq.f32.partialorder %v790, 0.0
      %v923 = vand.u32 %v790, 2147483648
      %v924 = vsel %vm922, %v923, %v921
      %v925 = vrsqrt.pop %v791
      %v926 = vmul.f32 %v791, %v925
      %vm927 = vcmp.eq.f32.partialorder %v791, inf
      %v928 = vsel %vm927, %v791, %v926
      %vm929 = vcmp.eq.f32.partialorder %v791, 0.0
      %v930 = vand.u32 %v791, 2147483648
      %v931 = vsel %vm929, %v930, %v928
      %v932 = vrsqrt.pop %v792
      %v933 = vmul.f32 %v792, %v932
      %vm934 = vcmp.eq.f32.partialorder %v792, inf
      %v935 = vsel %vm934, %v792, %v933
      %vm936 = vcmp.eq.f32.partialorder %v792, 0.0
      %v937 = vand.u32 %v792, 2147483648
      %v938 = vsel %vm936, %v937, %v935
      %v939 = vrsqrt.pop %v793
      %v940 = vmul.f32 %v793, %v939
      %vm941 = vcmp.eq.f32.partialorder %v793, inf
      %v942 = vsel %vm941, %v793, %v940
      %vm943 = vcmp.eq.f32.partialorder %v793, 0.0
      %v944 = vand.u32 %v793, 2147483648
      %v945 = vsel %vm943, %v944, %v942
      %v946 = vrsqrt.pop %v794
      %v947 = vmul.f32 %v794, %v946
      %vm948 = vcmp.eq.f32.partialorder %v794, inf
      %v949 = vsel %vm948, %v794, %v947
      %vm950 = vcmp.eq.f32.partialorder %v794, 0.0
      %v951 = vand.u32 %v794, 2147483648
      %v952 = vsel %vm950, %v951, %v949
      %v953 = vrsqrt.pop %v795
      %v954 = vmul.f32 %v795, %v953
      %vm955 = vcmp.eq.f32.partialorder %v795, inf
      %v956 = vsel %vm955, %v795, %v954
      %vm957 = vcmp.eq.f32.partialorder %v795, 0.0
      %v958 = vand.u32 %v795, 2147483648
      %v959 = vsel %vm957, %v958, %v956
      %v960 = vrsqrt.pop %v796
      %v961 = vmul.f32 %v796, %v960
      %vm962 = vcmp.eq.f32.partialorder %v796, inf
      %v963 = vsel %vm962, %v796, %v961
      %vm964 = vcmp.eq.f32.partialorder %v796, 0.0
      %v965 = vand.u32 %v796, 2147483648
      %v966 = vsel %vm964, %v965, %v963
      %v967 = vrsqrt.pop %v797
      %v968 = vmul.f32 %v797, %v967
      %vm969 = vcmp.eq.f32.partialorder %v797, inf
      %v970 = vsel %vm969, %v797, %v968
      %vm971 = vcmp.eq.f32.partialorder %v797, 0.0
      %v972 = vand.u32 %v797, 2147483648
      %v973 = vsel %vm971, %v972, %v970
      %v974 = vrsqrt.pop %v798
      %v975 = vmul.f32 %v798, %v974
      %vm976 = vcmp.eq.f32.partialorder %v798, inf
      %v977 = vsel %vm976, %v798, %v975
      %vm978 = vcmp.eq.f32.partialorder %v798, 0.0
      %v979 = vand.u32 %v798, 2147483648
      %v980 = vsel %vm978, %v979, %v977
      %v981 = vrsqrt.pop %v799
      %v982 = vmul.f32 %v799, %v981
      %vm983 = vcmp.eq.f32.partialorder %v799, inf
      %v984 = vsel %vm983, %v799, %v982
      %vm985 = vcmp.eq.f32.partialorder %v799, 0.0
      %v986 = vand.u32 %v799, 2147483648
      %v987 = vsel %vm985, %v986, %v984
      %v988 = vrsqrt.pop %v800
      %v989 = vmul.f32 %v800, %v988
      %vm990 = vcmp.eq.f32.partialorder %v800, inf
      %v991 = vsel %vm990, %v800, %v989
      %vm992 = vcmp.eq.f32.partialorder %v800, 0.0
      %v993 = vand.u32 %v800, 2147483648
      %v994 = vsel %vm992, %v993, %v991
      %v995 = vrsqrt.pop %v801
      %v996 = vmul.f32 %v801, %v995
      %vm997 = vcmp.eq.f32.partialorder %v801, inf
      %v998 = vsel %vm997, %v801, %v996
      %vm999 = vcmp.eq.f32.partialorder %v801, 0.0
      %v1000 = vand.u32 %v801, 2147483648
      %v1001 = vsel %vm999, %v1000, %v998
      %v1002 = vrsqrt.pop %v802
      %v1003 = vmul.f32 %v802, %v1002
      %vm1004 = vcmp.eq.f32.partialorder %v802, inf
      %v1005 = vsel %vm1004, %v802, %v1003
      %vm1006 = vcmp.eq.f32.partialorder %v802, 0.0
      %v1007 = vand.u32 %v802, 2147483648
      %v1008 = vsel %vm1006, %v1007, %v1005
      %v1009 = vrsqrt.pop %v803
      %v1010 = vmul.f32 %v803, %v1009
      %vm1011 = vcmp.eq.f32.partialorder %v803, inf
      %v1012 = vsel %vm1011, %v803, %v1010
      %vm1013 = vcmp.eq.f32.partialorder %v803, 0.0
      %v1014 = vand.u32 %v803, 2147483648
      %v1015 = vsel %vm1013, %v1014, %v1012
      %v1016 = vrsqrt.pop %v804
      %v1017 = vmul.f32 %v804, %v1016
      %vm1018 = vcmp.eq.f32.partialorder %v804, inf
      %v1019 = vsel %vm1018, %v804, %v1017
      %vm1020 = vcmp.eq.f32.partialorder %v804, 0.0
      %v1021 = vand.u32 %v804, 2147483648
      %v1022 = vsel %vm1020, %v1021, %v1019
      %v1023 = vrsqrt.pop %v805
      %v1024 = vmul.f32 %v805, %v1023
      %vm1025 = vcmp.eq.f32.partialorder %v805, inf
      %v1026 = vsel %vm1025, %v805, %v1024
      %vm1027 = vcmp.eq.f32.partialorder %v805, 0.0
      %v1028 = vand.u32 %v805, 2147483648
      %v1029 = vsel %vm1027, %v1028, %v1026
      %v1030 = vmul.f32 %v812, 0.125
      %v1031 = vmul.f32 %v819, 0.125
      %v1032 = vmul.f32 %v826, 0.125
      %v1033 = vmul.f32 %v833, 0.125
      %v1034 = vmul.f32 %v840, 0.125
      %v1035 = vmul.f32 %v847, 0.125
      %v1036 = vmul.f32 %v854, 0.125
      %v1037 = vmul.f32 %v861, 0.125
      %v1038 = vmul.f32 %v868, 0.125
      %v1039 = vmul.f32 %v875, 0.125
      %v1040 = vmul.f32 %v882, 0.125
      %v1041 = vmul.f32 %v889, 0.125
      %v1042 = vmul.f32 %v896, 0.125
      %v1043 = vmul.f32 %v903, 0.125
      %v1044 = vmul.f32 %v910, 0.125
      %v1045 = vmul.f32 %v917, 0.125
      %v1046 = vmul.f32 %v924, 0.125
      %v1047 = vmul.f32 %v931, 0.125
      %v1048 = vmul.f32 %v938, 0.125
      %v1049 = vmul.f32 %v945, 0.125
      %v1050 = vmul.f32 %v952, 0.125
      %v1051 = vmul.f32 %v959, 0.125
      %v1052 = vmul.f32 %v966, 0.125
      %v1053 = vmul.f32 %v973, 0.125
      %v1054 = vmul.f32 %v980, 0.125
      %v1055 = vmul.f32 %v987, 0.125
      %v1056 = vmul.f32 %v994, 0.125
      %v1057 = vmul.f32 %v1001, 0.125
      %v1058 = vmul.f32 %v1008, 0.125
      %v1059 = vmul.f32 %v1015, 0.125
      %v1060 = vmul.f32 %v1022, 0.125
      %v1061 = vmul.f32 %v1029, 0.125
      %s1062 = sld [smem:[#allocation2]]
      %v1063 = vld [vmem:[%s4] sm:$0x3]
      %v1064 = vld [vmem:[%s319] sm:$0xff]
      %v1065 = vld [vmem:[%s319 + $0x8] sm:$0xff]
      %v1066 = vld [vmem:[%s319 + $0x10] sm:$0xff]
      %v1067 = vld [vmem:[%s319 + $0x18] sm:$0xff]
      %v1068 = vld [vmem:[%s319 + $0x20] sm:$0xff]
      %v1069 = vld [vmem:[%s319 + $0x28] sm:$0xff]
      %v1070 = vld [vmem:[%s319 + $0x30] sm:$0xff]
      %v1071 = vld [vmem:[%s319 + $0x38] sm:$0xff]
      %v1072 = vld [vmem:[%s319 + $0x40] sm:$0xff]
      %v1073 = vld [vmem:[%s319 + $0x48] sm:$0xff]
      %v1074 = vld [vmem:[%s319 + $0x50] sm:$0xff]
      %v1075 = vld [vmem:[%s319 + $0x58] sm:$0xff]
      %v1076 = vld [vmem:[%s319 + $0x60] sm:$0xff]
      %v1077 = vld [vmem:[%s319 + $0x68] sm:$0xff]
      %v1078 = vld [vmem:[%s319 + $0x70] sm:$0xff]
      %v1079 = vld [vmem:[%s319 + $0x78] sm:$0xff]
      %v1081 = vlaneseq
      %v1082 = vshrl.u32 %v1081, 7
      %v1083 = vsub.s32 0, %v1082
      %v1084 = vrot.slane %v1063, %v1083
      %v1085 = vlaneseq
      %v1086 = vshrl.u32 %v1085, 7
      %v1087 = vsub.s32 1, %v1086
      %v1088 = vrot.slane %v1063, %v1087
      %1092 = vset.pattern.permute.xlu0 0
      %1093 = vperm.xlu0 %1092, %v1064
      %v1094 = vpop.permute.xlu0 %1093
      %1097 = vset.pattern.permute.xlu0 0
      %1098 = vperm.xlu0 %1097, %v1065
      %v1099 = vpop.permute.xlu0 %1098
      %1102 = vset.pattern.permute.xlu0 0
      %1103 = vperm.xlu0 %1102, %v1066
      %v1104 = vpop.permute.xlu0 %1103
      %1107 = vset.pattern.permute.xlu0 0
      %1108 = vperm.xlu0 %1107, %v1067
      %v1109 = vpop.permute.xlu0 %1108
      %1112 = vset.pattern.permute.xlu0 0
      %1113 = vperm.xlu0 %1112, %v1068
      %v1114 = vpop.permute.xlu0 %1113
      %1117 = vset.pattern.permute.xlu0 0
      %1118 = vperm.xlu0 %1117, %v1069
      %v1119 = vpop.permute.xlu0 %1118
      %1122 = vset.pattern.permute.xlu0 0
      %1123 = vperm.xlu0 %1122, %v1070
      %v1124 = vpop.permute.xlu0 %1123
      %1127 = vset.pattern.permute.xlu0 0
      %1128 = vperm.xlu0 %1127, %v1071
      %v1129 = vpop.permute.xlu0 %1128
      %1132 = vset.pattern.permute.xlu0 0
      %1133 = vperm.xlu0 %1132, %v1072
      %v1134 = vpop.permute.xlu0 %1133
      %1137 = vset.pattern.permute.xlu0 0
      %1138 = vperm.xlu0 %1137, %v1073
      %v1139 = vpop.permute.xlu0 %1138
      %1142 = vset.pattern.permute.xlu0 0
      %1143 = vperm.xlu0 %1142, %v1074
      %v1144 = vpop.permute.xlu0 %1143
      %1147 = vset.pattern.permute.xlu0 0
      %1148 = vperm.xlu0 %1147, %v1075
      %v1149 = vpop.permute.xlu0 %1148
      %1152 = vset.pattern.permute.xlu0 0
      %1153 = vperm.xlu0 %1152, %v1076
      %v1154 = vpop.permute.xlu0 %1153
      %1157 = vset.pattern.permute.xlu0 0
      %1158 = vperm.xlu0 %1157, %v1077
      %v1159 = vpop.permute.xlu0 %1158
      %1162 = vset.pattern.permute.xlu0 0
      %1163 = vperm.xlu0 %1162, %v1078
      %v1164 = vpop.permute.xlu0 %1163
      %1167 = vset.pattern.permute.xlu0 0
      %1168 = vperm.xlu0 %1167, %v1079
      %v1169 = vpop.permute.xlu0 %1168
      %vm1171 = vcmp.gt.f32.partialorder %v1084, %v1094
      %vm1172 = vcmp.gt.f32.partialorder %v1088, %v1094
      %vm1173 = vcmp.gt.f32.partialorder %v1084, %v1099
      %vm1174 = vcmp.gt.f32.partialorder %v1088, %v1099
      %vm1175 = vcmp.gt.f32.partialorder %v1084, %v1104
      %vm1176 = vcmp.gt.f32.partialorder %v1088, %v1104
      %vm1177 = vcmp.gt.f32.partialorder %v1084, %v1109
      %vm1178 = vcmp.gt.f32.partialorder %v1088, %v1109
      %vm1179 = vcmp.gt.f32.partialorder %v1084, %v1114
      %vm1180 = vcmp.gt.f32.partialorder %v1088, %v1114
      %vm1181 = vcmp.gt.f32.partialorder %v1084, %v1119
      %vm1182 = vcmp.gt.f32.partialorder %v1088, %v1119
      %vm1183 = vcmp.gt.f32.partialorder %v1084, %v1124
      %vm1184 = vcmp.gt.f32.partialorder %v1088, %v1124
      %vm1185 = vcmp.gt.f32.partialorder %v1084, %v1129
      %vm1186 = vcmp.gt.f32.partialorder %v1088, %v1129
      %vm1187 = vcmp.gt.f32.partialorder %v1084, %v1134
      %vm1188 = vcmp.gt.f32.partialorder %v1088, %v1134
      %vm1189 = vcmp.gt.f32.partialorder %v1084, %v1139
      %vm1190 = vcmp.gt.f32.partialorder %v1088, %v1139
      %vm1191 = vcmp.gt.f32.partialorder %v1084, %v1144
      %vm1192 = vcmp.gt.f32.partialorder %v1088, %v1144
      %vm1193 = vcmp.gt.f32.partialorder %v1084, %v1149
      %vm1194 = vcmp.gt.f32.partialorder %v1088, %v1149
      %vm1195 = vcmp.gt.f32.partialorder %v1084, %v1154
      %vm1196 = vcmp.gt.f32.partialorder %v1088, %v1154
      %vm1197 = vcmp.gt.f32.partialorder %v1084, %v1159
      %vm1198 = vcmp.gt.f32.partialorder %v1088, %v1159
      %vm1199 = vcmp.gt.f32.partialorder %v1084, %v1164
      %vm1200 = vcmp.gt.f32.partialorder %v1088, %v1164
      %vm1201 = vcmp.gt.f32.partialorder %v1084, %v1169
      %vm1202 = vcmp.gt.f32.partialorder %v1088, %v1169
      %v1203 = vstv %s1062
      %v1204 = vsel %vm1171, %v1030, %v1203
      %v1205 = vsel %vm1172, %v1031, %v1203
      %v1206 = vsel %vm1173, %v1032, %v1203
      %v1207 = vsel %vm1174, %v1033, %v1203
      %v1208 = vsel %vm1175, %v1034, %v1203
      %v1209 = vsel %vm1176, %v1035, %v1203
      %v1210 = vsel %vm1177, %v1036, %v1203
      %v1211 = vsel %vm1178, %v1037, %v1203
      %v1212 = vsel %vm1179, %v1038, %v1203
      %v1213 = vsel %vm1180, %v1039, %v1203
      %v1214 = vsel %vm1181, %v1040, %v1203
      %v1215 = vsel %vm1182, %v1041, %v1203
      %v1216 = vsel %vm1183, %v1042, %v1203
      %v1217 = vsel %vm1184, %v1043, %v1203
      %v1218 = vsel %vm1185, %v1044, %v1203
      %v1219 = vsel %vm1186, %v1045, %v1203
      %v1220 = vsel %vm1187, %v1046, %v1203
      %v1221 = vsel %vm1188, %v1047, %v1203
      %v1222 = vsel %vm1189, %v1048, %v1203
      %v1223 = vsel %vm1190, %v1049, %v1203
      %v1224 = vsel %vm1191, %v1050, %v1203
      %v1225 = vsel %vm1192, %v1051, %v1203
      %v1226 = vsel %vm1193, %v1052, %v1203
      %v1227 = vsel %vm1194, %v1053, %v1203
      %v1228 = vsel %vm1195, %v1054, %v1203
      %v1229 = vsel %vm1196, %v1055, %v1203
      %v1230 = vsel %vm1197, %v1056, %v1203
      %v1231 = vsel %vm1198, %v1057, %v1203
      %v1232 = vsel %vm1199, %v1058, %v1203
      %v1233 = vsel %vm1200, %v1059, %v1203
      %v1234 = vsel %vm1201, %v1060, %v1203
      %v1235 = vsel %vm1202, %v1061, %v1203
      %v1236 = vmin.f32 %v1204, %v1205
      %1237 = vmin.xlane.f32.xlu0 %v1236
      %v1238 = vpop.xlane.xlu0 %1237
      %v1239 = vmin.f32 %v1206, %v1207
      %1240 = vmin.xlane.f32.xlu0 %v1239
      %v1241 = vpop.xlane.xlu0 %1240
      %v1242 = vmin.f32 %v1208, %v1209
      %1243 = vmin.xlane.f32.xlu0 %v1242
      %v1244 = vpop.xlane.xlu0 %1243
      %v1245 = vmin.f32 %v1210, %v1211
      %1246 = vmin.xlane.f32.xlu0 %v1245
      %v1247 = vpop.xlane.xlu0 %1246
      %v1248 = vmin.f32 %v1212, %v1213
      %1249 = vmin.xlane.f32.xlu0 %v1248
      %v1250 = vpop.xlane.xlu0 %1249
      %v1251 = vmin.f32 %v1214, %v1215
      %1252 = vmin.xlane.f32.xlu0 %v1251
      %v1253 = vpop.xlane.xlu0 %1252
      %v1254 = vmin.f32 %v1216, %v1217
      %1255 = vmin.xlane.f32.xlu0 %v1254
      %v1256 = vpop.xlane.xlu0 %1255
      %v1257 = vmin.f32 %v1218, %v1219
      %1258 = vmin.xlane.f32.xlu0 %v1257
      %v1259 = vpop.xlane.xlu0 %1258
      %v1260 = vmin.f32 %v1220, %v1221
      %1261 = vmin.xlane.f32.xlu0 %v1260
      %v1262 = vpop.xlane.xlu0 %1261
      %v1263 = vmin.f32 %v1222, %v1223
      %1264 = vmin.xlane.f32.xlu0 %v1263
      %v1265 = vpop.xlane.xlu0 %1264
      %v1266 = vmin.f32 %v1224, %v1225
      %1267 = vmin.xlane.f32.xlu0 %v1266
      %v1268 = vpop.xlane.xlu0 %1267
      %v1269 = vmin.f32 %v1226, %v1227
      %1270 = vmin.xlane.f32.xlu0 %v1269
      %v1271 = vpop.xlane.xlu0 %1270
      %v1272 = vmin.f32 %v1228, %v1229
      %1273 = vmin.xlane.f32.xlu0 %v1272
      %v1274 = vpop.xlane.xlu0 %1273
      %v1275 = vmin.f32 %v1230, %v1231
      %1276 = vmin.xlane.f32.xlu0 %v1275
      %v1277 = vpop.xlane.xlu0 %1276
      %v1278 = vmin.f32 %v1232, %v1233
      %1279 = vmin.xlane.f32.xlu0 %v1278
      %v1280 = vpop.xlane.xlu0 %1279
      %v1281 = vmin.f32 %v1234, %v1235
      %1282 = vmin.xlane.f32.xlu0 %v1281
      %v1283 = vpop.xlane.xlu0 %1282
      %v1284 = vmul.f32 %v1238, %v1064
      %v1285 = vmul.f32 %v1241, %v1065
      %v1286 = vmul.f32 %v1244, %v1066
      %v1287 = vmul.f32 %v1247, %v1067
      %v1288 = vmul.f32 %v1250, %v1068
      %v1289 = vmul.f32 %v1253, %v1069
      %v1290 = vmul.f32 %v1256, %v1070
      %v1291 = vmul.f32 %v1259, %v1071
      %v1292 = vmul.f32 %v1262, %v1072
      %v1293 = vmul.f32 %v1265, %v1073
      %v1294 = vmul.f32 %v1268, %v1074
      %v1295 = vmul.f32 %v1271, %v1075
      %v1296 = vmul.f32 %v1274, %v1076
      %v1297 = vmul.f32 %v1277, %v1077
      %v1298 = vmul.f32 %v1280, %v1078
      %v1299 = vmul.f32 %v1283, %v1079
      %vm1300 = vcmask 7168
      %1301 = vst.msk [vmem:[%s325] sm:$0xff] %vm1300, %v1284
      %1302 = vst.msk [vmem:[%s325 + $0x8] sm:$0xff] %vm1300, %v1285
      %1303 = vst.msk [vmem:[%s325 + $0x10] sm:$0xff] %vm1300, %v1286
      %1304 = vst.msk [vmem:[%s325 + $0x18] sm:$0xff] %vm1300, %v1287
      %1305 = vst.msk [vmem:[%s325 + $0x20] sm:$0xff] %vm1300, %v1288
      %1306 = vst.msk [vmem:[%s325 + $0x28] sm:$0xff] %vm1300, %v1289
      %1307 = vst.msk [vmem:[%s325 + $0x30] sm:$0xff] %vm1300, %v1290
      %1308 = vst.msk [vmem:[%s325 + $0x38] sm:$0xff] %vm1300, %v1291
      %1309 = vst.msk [vmem:[%s325 + $0x40] sm:$0xff] %vm1300, %v1292
      %1310 = vst.msk [vmem:[%s325 + $0x48] sm:$0xff] %vm1300, %v1293
      %1311 = vst.msk [vmem:[%s325 + $0x50] sm:$0xff] %vm1300, %v1294
      %1312 = vst.msk [vmem:[%s325 + $0x58] sm:$0xff] %vm1300, %v1295
      %1313 = vst.msk [vmem:[%s325 + $0x60] sm:$0xff] %vm1300, %v1296
      %1314 = vst.msk [vmem:[%s325 + $0x68] sm:$0xff] %vm1300, %v1297
      %1315 = vst.msk [vmem:[%s325 + $0x70] sm:$0xff] %vm1300, %v1298
      %1316 = vst.msk [vmem:[%s325 + $0x78] sm:$0xff] %vm1300, %v1299
      %s1317 = smul.u32 16, %s19
      %p1318 = scmp.lt.s32.totalorder %s1317, 31
      %s1319 = scalar_select %p1318, %s1317, 31
      %s1320 = smul.addr %s1319, 8
      %s1321 = scalar_lea.vmem %s7, %s1320
      // Predicated region
      $region49: #{_fastv_cluster_jit.3} parent=47 // pred_check
        %p1322 = pneg %p199
      $region50: #{_fastv_cluster_jit.3} parent=47 // pred_check_branch
        %1324 = sbr.rel (%p1322) target = $region52
      $region51: #{_fastv_cluster_jit.3} parent=47 // pred_region
        %s1325 = smul.u32 16, %s19
      $region52: #{_fastv_cluster_jit.3} parent=47 // pred_fallthru
        _
    $region48: #{_fastv_cluster_jit.3} parent=5 // pred_fallthru
      _
    %p1326 = scmp.le.s32.totalorder 2, %s14
    // Predicated region
    $region53: #{_fastv_cluster_jit.3} parent=5 // pred_check
      %p1327 = pneg %p1326
    $region54: #{_fastv_cluster_jit.3} parent=5 // pred_check_branch
      %1329 = sbr.rel (%p1327) target = $region56
    $region55: #{_fastv_cluster_jit.3} parent=5 // pred_region
      %s1330 = ssub.s32 %s14, 2
      // Predicated region
      $region57: #{_fastv_cluster_jit.3} parent=55 // pred_check
        %p1331 = pneg %p205
      $region58: #{_fastv_cluster_jit.3} parent=55 // pred_check_branch
        %1333 = sbr.rel (%p1331) target = $region60
      $region59: #{_fastv_cluster_jit.3} parent=55 // pred_region
        %s1334 = smul.u32 16, %s20
        %p1335 = scmp.lt.s32.totalorder %s1334, 31
        %s1336 = scalar_select %p1335, %s1334, 31
        %s1337 = smul.addr %s1336, 8
        %s1338 = scalar_lea.vmem %s7, %s1337
      $region60: #{_fastv_cluster_jit.3} parent=55 // pred_fallthru
        _
    $region56: #{_fastv_cluster_jit.3} parent=5 // pred_fallthru
      _
  $region6: #{_fastv_cluster_jit.3} parent=0 // loop_footer
    %s18 = sadd.s32 1, %s14
  $region7: #{_fastv_cluster_jit.3} parent=0 // loop_footer_branch
    %13 = sbr.rel target = $region3
  $region8: #{_fastv_cluster_jit.3} parent=0 // loop_exit
    _

// kernel: _fastv_cluster_jit.2
$region0: #{_fastv_cluster_jit.2}
  #allocation0 [shape = 'u32[]', space=smem, size = 0x4, offset = 0x4, fixed_abs, tag = 'smem constant byte address 0x4 - core index']
  #allocation1 [shape = 'u32[144,128]{1,0:T(1,128)}', space=vmem, size = 0x12000, scoped, tag = 'internal scratch']
  %s0 = inlined_call_operand.vmem [shape: bf16[256,64], index: 0, kind: input, shape index: {}]
  %s1 = inlined_call_operand.vmem [shape: bf16[64,256], index: 1, kind: input, shape index: {}]
  %s2 = inlined_call_operand.vmem [shape: f32[1,256], index: 2, kind: input, shape index: {}]
  %s3 = inlined_call_operand.vmem [shape: f32[256,1], index: 3, kind: input, shape index: {}]
  %s4 = inlined_call_operand.vmem [shape: f32[256,1], index: 4, kind: output, shape index: {0}]
  %s5 = inlined_call_operand.vmem [shape: f32[256,1], index: 5, kind: output, shape index: {1}]
  %6 = xla_tuple %s4, %s5
  %s7 = sld [smem:[#allocation0]]
  $region57: #{_fastv_cluster_jit.2} parent=0
    _
  %s9 = ssub.s32 1, %s7
  %s10 = scalar_select 0, %s9, %s7
  loop: start=0, step=1, limit=4
  $region2: #{_fastv_cluster_jit.2} parent=0 // loop_pre_header
    _
  $region3: #{_fastv_cluster_jit.2} parent=0 // loop_header
    %s12 = sphi 0, %s16
    %p13 = scmp.ge.s32.totalorder %s12, 4
    %s22 = sphi 0, %s24
    %s25 = sphi 0, %s22
    %s26 = sphi 0, %s25
    %s42 = sphi 0, %s26
    %s46 = sphi 0, %s46
    %s48 = sphi 0, %s46
    %s49 = sphi 0, %s48
    %s63 = sphi 0, %s49
    %s67 = sphi 0, %s67
    %s69 = sphi 0, %s67
    %s70 = sphi 0, %s69
    %s84 = sphi 0, %s70
    %s90 = sphi 0, %s92
    %s93 = sphi 0, %s90
    %s94 = sphi 0, %s93
    %s110 = sphi 0, %s94
    %s116 = sphi 0, %s118
    %s119 = sphi 0, %s116
    %s120 = sphi 0, %s119
    %s136 = sphi 0, %s120
    %s142 = sphi 0, %s144
    %s145 = sphi 0, %s142
    %s146 = sphi 0, %s145
    %s162 = sphi 0, %s146
  $region4: #{_fastv_cluster_jit.2} parent=0 // loop_header_branch
    %15 = sbr.rel (%p13) target = $region8
  $region5: #{_fastv_cluster_jit.2} parent=0 // loop_body
    %s17 = ssub.s32 %s12, 1
    %s18 = ssub.s32 %s12, 2
    %s19 = sadd.s32 %s12, 1
    %s20 = ssub.s32 %s12, %s19
    %p21 = scmp.eq.s32.totalorder %s20, 0
    %s23 = sadd.s32 %s22, 1
    %s24 = scalar_select %p21, %s22, %s23
    %p27 = pneg %p21
    %p28 = scmp.eq.s32.totalorder %s12, 1
    %p29 = por %p27, %p28
    %p30 = scmp.ne.s32.totalorder %s22, %s25
    %p31 = scmp.eq.s32.totalorder %s12, 0
    %p32 = por %p30, %p31
    %p33 = scmp.ne.s32.totalorder %s22, %s25
    %p34 = scmp.eq.s32.totalorder %s17, 1
    %p35 = por %p33, %p34
    %p36 = scmp.ne.s32.totalorder %s25, %s26
    %p37 = scmp.eq.s32.totalorder %s17, 0
    %p38 = por %p36, %p37
    %p39 = scmp.ne.s32.totalorder %s25, %s26
    %p40 = scmp.eq.s32.totalorder %s18, 1
    %p41 = por %p39, %p40
    %p43 = scmp.ne.s32.totalorder %s26, %s42
    %p44 = scmp.eq.s32.totalorder %s18, 0
    %p45 = por %p43, %p44
    %s47 = sadd.s32 %s46, 1
    %p50 = scmp.eq.s32.totalorder %s12, 1
    %p51 = scmp.ne.s32.totalorder %s46, %s48
    %p52 = scmp.eq.s32.totalorder %s12, 0
    %p53 = por %p51, %p52
    %p54 = scmp.ne.s32.totalorder %s46, %s48
    %p55 = scmp.eq.s32.totalorder %s17, 1
    %p56 = por %p54, %p55
    %p57 = scmp.ne.s32.totalorder %s48, %s49
    %p58 = scmp.eq.s32.totalorder %s17, 0
    %p59 = por %p57, %p58
    %p60 = scmp.ne.s32.totalorder %s48, %s49
    %p61 = scmp.eq.s32.totalorder %s18, 1
    %p62 = por %p60, %p61
    %p64 = scmp.ne.s32.totalorder %s49, %s63
    %p65 = scmp.eq.s32.totalorder %s18, 0
    %p66 = por %p64, %p65
    %s68 = sadd.s32 %s67, 1
    %p71 = scmp.eq.s32.totalorder %s12, 1
    %p72 = scmp.ne.s32.totalorder %s67, %s69
    %p73 = scmp.eq.s32.totalorder %s12, 0
    %p74 = por %p72, %p73
    %p75 = scmp.ne.s32.totalorder %s67, %s69
    %p76 = scmp.eq.s32.totalorder %s17, 1
    %p77 = por %p75, %p76
    %p78 = scmp.ne.s32.totalorder %s69, %s70
    %p79 = scmp.eq.s32.totalorder %s17, 0
    %p80 = por %p78, %p79
    %p81 = scmp.ne.s32.totalorder %s69, %s70
    %p82 = scmp.eq.s32.totalorder %s18, 1
    %p83 = por %p81, %p82
    %p85 = scmp.ne.s32.totalorder %s70, %s84
    %p86 = scmp.eq.s32.totalorder %s18, 0
    %p87 = por %p85, %p86
    %s88 = ssub.s32 %s12, %s19
    %p89 = scmp.eq.s32.totalorder %s88, 0
    %s91 = sadd.s32 %s90, 1
    %s92 = scalar_select %p89, %s90, %s91
    %p95 = pneg %p89
    %p96 = scmp.eq.s32.totalorder %s12, 1
    %p97 = por %p95, %p96
    %p98 = scmp.ne.s32.totalorder %s90, %s93
    %p99 = scmp.eq.s32.totalorder %s12, 0
    %p100 = por %p98, %p99
    %p101 = scmp.ne.s32.totalorder %s90, %s93
    %p102 = scmp.eq.s32.totalorder %s17, 1
    %p103 = por %p101, %p102
    %p104 = scmp.ne.s32.totalorder %s93, %s94
    %p105 = scmp.eq.s32.totalorder %s17, 0
    %p106 = por %p104, %p105
    %p107 = scmp.ne.s32.totalorder %s93, %s94
    %p108 = scmp.eq.s32.totalorder %s18, 1
    %p109 = por %p107, %p108
    %p111 = scmp.ne.s32.totalorder %s94, %s110
    %p112 = scmp.eq.s32.totalorder %s18, 0
    %p113 = por %p111, %p112
    %s114 = ssub.s32 %s12, %s19
    %p115 = scmp.eq.s32.totalorder %s114, 0
    %s117 = sadd.s32 %s116, 1
    %s118 = scalar_select %p115, %s116, %s117
    %p121 = pneg %p115
    %p122 = scmp.eq.s32.totalorder %s12, 1
    %p123 = por %p121, %p122
    %p124 = scmp.ne.s32.totalorder %s116, %s119
    %p125 = scmp.eq.s32.totalorder %s12, 0
    %p126 = por %p124, %p125
    %p127 = scmp.ne.s32.totalorder %s116, %s119
    %p128 = scmp.eq.s32.totalorder %s17, 1
    %p129 = por %p127, %p128
    %p130 = scmp.ne.s32.totalorder %s119, %s120
    %p131 = scmp.eq.s32.totalorder %s17, 0
    %p132 = por %p130, %p131
    %p133 = scmp.ne.s32.totalorder %s119, %s120
    %p134 = scmp.eq.s32.totalorder %s18, 1
    %p135 = por %p133, %p134
    %p137 = scmp.ne.s32.totalorder %s120, %s136
    %p138 = scmp.eq.s32.totalorder %s18, 0
    %p139 = por %p137, %p138
    %s140 = ssub.s32 %s12, %s19
    %p141 = scmp.eq.s32.totalorder %s140, 0
    %s143 = sadd.s32 %s142, 1
    %s144 = scalar_select %p141, %s142, %s143
    %p147 = pneg %p141
    %p148 = scmp.eq.s32.totalorder %s12, 1
    %p149 = por %p147, %p148
    %p150 = scmp.ne.s32.totalorder %s142, %s145
    %p151 = scmp.eq.s32.totalorder %s12, 0
    %p152 = por %p150, %p151
    %p153 = scmp.ne.s32.totalorder %s142, %s145
    %p154 = scmp.eq.s32.totalorder %s17, 1
    %p155 = por %p153, %p154
    %p156 = scmp.ne.s32.totalorder %s145, %s146
    %p157 = scmp.eq.s32.totalorder %s17, 0
    %p158 = por %p156, %p157
    %p159 = scmp.ne.s32.totalorder %s145, %s146
    %p160 = scmp.eq.s32.totalorder %s18, 1
    %p161 = por %p159, %p160
    %p163 = scmp.ne.s32.totalorder %s146, %s162
    %p164 = scmp.eq.s32.totalorder %s18, 0
    %p165 = por %p163, %p164
    %p166 = scmp.le.s32.totalorder 1, %s12
    %p167 = scmp.lt.s32.totalorder %s12, 3
    %p168 = pnand %p166, %p167
    %p169 = pneg %p168
    // Predicated region
    $region9: #{_fastv_cluster_jit.2} parent=5 // pred_check
      _
    $region10: #{_fastv_cluster_jit.2} parent=5 // pred_check_branch
      %171 = sbr.rel (%p168) target = $region12
    $region11: #{_fastv_cluster_jit.2} parent=5 // pred_region
      %s172 = ssub.s32 %s12, 1
      // Predicated region
      $region13: #{_fastv_cluster_jit.2} parent=11 // pred_check
        %p173 = pneg %p59
      $region14: #{_fastv_cluster_jit.2} parent=11 // pred_check_branch
        %175 = sbr.rel (%p173) target = $region16
      $region15: #{_fastv_cluster_jit.2} parent=11 // pred_region
        _
      $region16: #{_fastv_cluster_jit.2} parent=11 // pred_fallthru
        _
      // Predicated region
      $region17: #{_fastv_cluster_jit.2} parent=11 // pred_check
        %p176 = pneg %p80
      $region18: #{_fastv_cluster_jit.2} parent=11 // pred_check_branch
        %178 = sbr.rel (%p176) target = $region20
      $region19: #{_fastv_cluster_jit.2} parent=11 // pred_region
        _
      $region20: #{_fastv_cluster_jit.2} parent=11 // pred_fallthru
        _
    $region12: #{_fastv_cluster_jit.2} parent=5 // pred_fallthru
      _
    %p179 = scmp.lt.s32.totalorder %s12, 2
    // Predicated region
    $region21: #{_fastv_cluster_jit.2} parent=5 // pred_check
      %p180 = pneg %p179
    $region22: #{_fastv_cluster_jit.2} parent=5 // pred_check_branch
      %182 = sbr.rel (%p180) target = $region24
    $region23: #{_fastv_cluster_jit.2} parent=5 // pred_region
      // Predicated region
      $region25: #{_fastv_cluster_jit.2} parent=23 // pred_check
        %p183 = pneg %p32
      $region26: #{_fastv_cluster_jit.2} parent=23 // pred_check_branch
        %185 = sbr.rel (%p183) target = $region28
      $region27: #{_fastv_cluster_jit.2} parent=23 // pred_region
        %s186 = smul.u32 16, %s12
        %p187 = scmp.lt.s32.totalorder %s186, 31
        %s188 = scalar_select %p187, %s186, 31
        %s189 = smul.addr %s188, 4
        %s190 = scalar_lea.vmem %s0, %s189
        %s191 = smul.u32 16, %s12
      $region28: #{_fastv_cluster_jit.2} parent=23 // pred_fallthru
        _
      // Predicated region
      $region29: #{_fastv_cluster_jit.2} parent=23 // pred_check
        %p192 = pneg %p100
      $region30: #{_fastv_cluster_jit.2} parent=23 // pred_check_branch
        %194 = sbr.rel (%p192) target = $region32
      $region31: #{_fastv_cluster_jit.2} parent=23 // pred_region
        %s195 = smul.u32 16, %s12
        %p196 = scmp.lt.s32.totalorder %s195, 31
        %s197 = scalar_select %p196, %s195, 31
        %s198 = smul.addr %s197, 8
        %s199 = scalar_lea.vmem %s3, %s198
        %s200 = smul.u32 16, %s12
      $region32: #{_fastv_cluster_jit.2} parent=23 // pred_fallthru
        _
    $region24: #{_fastv_cluster_jit.2} parent=5 // pred_fallthru
      _
    %p201 = scmp.le.s32.totalorder 1, %s12
    %p202 = scmp.lt.s32.totalorder %s12, 3
    %p203 = pnand %p201, %p202
    %p204 = pneg %p203
    // Predicated region
    $region33: #{_fastv_cluster_jit.2} parent=5 // pred_check
      _
    $region34: #{_fastv_cluster_jit.2} parent=5 // pred_check_branch
      %206 = sbr.rel (%p203) target = $region36
    $region35: #{_fastv_cluster_jit.2} parent=5 // pred_region
      %s207 = ssub.s32 %s12, 1
      %s208 = smul.u32 16, %s17
      %p209 = scmp.lt.s32.totalorder %s208, 31
      %s210 = scalar_select %p209, %s208, 31
      %s211 = smul.addr %s210, 4
      %s212 = scalar_lea.vmem %s0, %s211
      %p213 = pneg %p38
      %p214 = pneg %p35
      %p215 = pneg %p59
      %p216 = pneg %p56
      %p217 = pneg %p80
      %p218 = pneg %p77
      %s219 = smul.u32 16, %s17
      %p220 = scmp.lt.s32.totalorder %s219, 31
      %s221 = scalar_select %p220, %s219, 31
      %s222 = smul.addr %s221, 8
      %s223 = scalar_lea.vmem %s3, %s222
      %p224 = pneg %p106
      %p225 = pneg %p103
      %p226 = pneg %p132
      %p227 = pneg %p129
      %s228 = smul.u32 16, %s17
      %p229 = scmp.lt.s32.totalorder %s228, 31
      %s230 = scalar_select %p229, %s228, 31
      %s231 = smul.addr %s230, 8
      %s232 = scalar_lea.vmem %s4, %s231
      %p233 = pneg %p158
      %p234 = pneg %p155
      %s235 = smul.u32 16, %s17
      %p236 = scmp.lt.s32.totalorder %s235, 31
      %s237 = scalar_select %p236, %s235, 31
      %s238 = smul.addr %s237, 8
      %s239 = scalar_lea.vmem %s5, %s238
      %s240 = smul.u32 16, %s17
      %p241 = scmp.lt.s32.totalorder %s240, 31
      %s242 = scalar_select %p241, %s240, 31
      %s243 = smul.addr %s242, 4
      %s244 = scalar_lea.vmem %s0, %s243
      %s245 = smul.u32 16, %s17
      %s246 = smul.u32 16, %s17
      %p247 = scmp.lt.s32.totalorder %s246, 31
      %s248 = scalar_select %p247, %s246, 31
      %s249 = smul.addr %s248, 8
      %s250 = scalar_lea.vmem %s3, %s249
      %s251 = smul.u32 16, %s17
      %s252 = smul.u32 16, %s17
      %p253 = scmp.lt.s32.totalorder %s252, 31
      %s254 = scalar_select %p253, %s252, 31
      %s255 = smul.addr %s254, 8
      %s256 = scalar_lea.vmem %s4, %s255
      %s257 = smul.u32 16, %s17
      %s258 = smul.u32 16, %s17
      %p259 = scmp.lt.s32.totalorder %s258, 31
      %s260 = scalar_select %p259, %s258, 31
      %s261 = smul.addr %s260, 8
      %s262 = scalar_lea.vmem %s5, %s261
      %s263 = smul.u32 16, %s17
      %v265 = vld [vmem:[%s244] sm:$0xf]
      %v266 = vld [vmem:[%s244 + $0x4] sm:$0xf]
      %v267 = vld [vmem:[%s244 + $0x8] sm:$0xf]
      %v268 = vld [vmem:[%s244 + $0xc] sm:$0xf]
      %v269 = vld [vmem:[%s244 + $0x10] sm:$0xf]
      %v270 = vld [vmem:[%s244 + $0x14] sm:$0xf]
      %v271 = vld [vmem:[%s244 + $0x18] sm:$0xf]
      %v272 = vld [vmem:[%s244 + $0x1c] sm:$0xf]
      %v273 = vld [vmem:[%s244 + $0x20] sm:$0xf]
      %v274 = vld [vmem:[%s244 + $0x24] sm:$0xf]
      %v275 = vld [vmem:[%s244 + $0x28] sm:$0xf]
      %v276 = vld [vmem:[%s244 + $0x2c] sm:$0xf]
      %v277 = vld [vmem:[%s244 + $0x30] sm:$0xf]
      %v278 = vld [vmem:[%s244 + $0x34] sm:$0xf]
      %v279 = vld [vmem:[%s244 + $0x38] sm:$0xf]
      %v280 = vld [vmem:[%s244 + $0x3c] sm:$0xf]
      %v281 = vld [vmem:[%s1] sm:$0xff]
      %v282 = vld [vmem:[%s1 + $0x8] sm:$0xff]
      %v283 = vld [vmem:[%s1 + $0x10] sm:$0xff]
      %v284 = vld [vmem:[%s1 + $0x18] sm:$0xff]
      %v285 = vld [vmem:[%s1 + $0x20] sm:$0xff]
      %v286 = vld [vmem:[%s1 + $0x28] sm:$0xff]
      %v287 = vld [vmem:[%s1 + $0x30] sm:$0xff]
      %v288 = vld [vmem:[%s1 + $0x38] sm:$0xff]
      %v305 = vunpack.c.l.b16 %v265
      %v306 = vunpack.c.l.b16 %v266
      %v307 = vunpack.c.l.b16 %v267
      %v308 = vunpack.c.l.b16 %v268
      %v309 = vunpack.c.l.b16 %v269
      %v310 = vunpack.c.l.b16 %v270
      %v311 = vunpack.c.l.b16 %v271
      %v312 = vunpack.c.l.b16 %v272
      %v313 = vunpack.c.l.b16 %v273
      %v314 = vunpack.c.l.b16 %v274
      %v315 = vunpack.c.l.b16 %v275
      %v316 = vunpack.c.l.b16 %v276
      %v317 = vunpack.c.l.b16 %v277
      %v318 = vunpack.c.l.b16 %v278
      %v319 = vunpack.c.l.b16 %v279
      %v320 = vunpack.c.l.b16 %v280
      %v321 = vpack.c.b16 %v306, %v305
      %v322 = vpack.c.b16 %v308, %v307
      %v323 = vpack.c.b16 %v310, %v309
      %v324 = vpack.c.b16 %v312, %v311
      %v325 = vpack.c.b16 %v314, %v313
      %v326 = vpack.c.b16 %v316, %v315
      %v327 = vpack.c.b16 %v318, %v317
      %v328 = vpack.c.b16 %v320, %v319
      %v337 = vunpack.c.l.b16 %v281
      %v338 = vunpack.c.h.b16 %v281
      %v339 = vunpack.c.l.b16 %v282
      %v340 = vunpack.c.h.b16 %v282
      %v341 = vunpack.c.l.b16 %v283
      %v342 = vunpack.c.h.b16 %v283
      %v343 = vunpack.c.l.b16 %v284
      %v344 = vunpack.c.h.b16 %v284
      %v345 = vunpack.c.l.b16 %v285
      %v346 = vunpack.c.h.b16 %v285
      %v347 = vunpack.c.l.b16 %v286
      %v348 = vunpack.c.h.b16 %v286
      %v349 = vunpack.c.l.b16 %v287
      %v350 = vunpack.c.h.b16 %v287
      %v351 = vunpack.c.l.b16 %v288
      %v352 = vunpack.c.h.b16 %v288
      %v353 = vpack.c.b16 %v339, %v337
      %v354 = vpack.c.b16 %v340, %v338
      %v355 = vpack.c.b16 %v343, %v341
      %v356 = vpack.c.b16 %v344, %v342
      %v357 = vpack.c.b16 %v347, %v345
      %v358 = vpack.c.b16 %v348, %v346
      %v359 = vpack.c.b16 %v351, %v349
      %v360 = vpack.c.b16 %v352, %v350
      %vm369 = vcmask 523264
      %v371 = vsel %vm369, %v321, 0
      %v374 = vsel %vm369, %v322, 0
      %v377 = vsel %vm369, %v323, 0
      %v380 = vsel %vm369, %v324, 0
      %v383 = vsel %vm369, %v325, 0
      %v386 = vsel %vm369, %v326, 0
      %v389 = vsel %vm369, %v327, 0
      %v392 = vsel %vm369, %v328, 0
      %394 = vmatprep.subr.bf16.mxu0 0
      %395 = vmatpush1.bf16.msra.mxu0 0
      %396 = vmatprep.subr.bf16.mxu0 0
      %397 = vmatpush1.bf16.msra.mxu0 0
      %398 = vmatprep.subr.bf16.mxu0 0
      %399 = vmatpush1.bf16.msra.mxu0 0
      %400 = vmatprep.subr.bf16.mxu0 0
      %401 = vmatpush1.bf16.msra.mxu0 0
      %402 = vmatprep.subr.bf16.mxu0 %v360
      %403 = vmatpush1.bf16.msra.mxu0 %v359
      %404 = vmatprep.subr.bf16.mxu0 %v358
      %405 = vmatpush1.bf16.msra.mxu0 %v357
      %406 = vmatprep.subr.bf16.mxu0 %v356
      %407 = vmatpush1.bf16.msra.mxu0 %v355
      %408 = vmatprep.subr.bf16.mxu0 %v354
      %409 = vmatpush1.bf16.msra.mxu0 %v353
      %410 = vmatprep.subr.bf16.mxu0 0
      %411 = vmatpush2.bf16.msra.mxu0 0
      %412 = vmatprep.subr.bf16.mxu0 0
      %413 = vmatpush2.bf16.msra.mxu0 0
      %414 = vmatprep.subr.bf16.mxu0 0
      %415 = vmatpush2.bf16.msra.mxu0 0
      %416 = vmatprep.subr.bf16.mxu0 0
      %417 = vmatpush2.bf16.msra.mxu0 0
      %418 = vmatprep.subr.bf16.mxu0 0
      %419 = vmatpush2.bf16.msra.mxu0 0
      %420 = vmatprep.subr.bf16.mxu0 0
      %421 = vmatpush2.bf16.msra.mxu0 0
      %422 = vmatprep.subr.bf16.mxu0 0
      %423 = vmatpush2.bf16.msra.mxu0 0
      %424 = vmatprep.subr.bf16.mxu0 0
      %425 = vmatpush2.bf16.msra.mxu0 0
      %426 = vmatprep.mubr.bf16.mxu0 0
      %427 = vmatmul.mubr.bf16.gmra.mxu0 %v371
      %v428 = vpop.f32.mrf.mxu0
      %v429 = vadd.f32 0.0, %v428
      %v430 = vpop.f32.mrf.mxu0
      %v431 = vadd.f32 0.0, %v430
      %v432 = vpop.f32.mrf.mxu0
      %v433 = vadd.f32 0.0, %v432
      %v434 = vpop.f32.mrf.mxu0
      %v435 = vadd.f32 0.0, %v434
      %436 = vmatprep.mubr.bf16.mxu0 0
      %437 = vmatmul.mubr.bf16.gmra.mxu0 %v374
      %v438 = vpop.f32.mrf.mxu0
      %v439 = vadd.f32 0.0, %v438
      %v440 = vpop.f32.mrf.mxu0
      %v441 = vadd.f32 0.0, %v440
      %v442 = vpop.f32.mrf.mxu0
      %v443 = vadd.f32 0.0, %v442
      %v444 = vpop.f32.mrf.mxu0
      %v445 = vadd.f32 0.0, %v444
      %446 = vmatprep.mubr.bf16.mxu0 0
      %447 = vmatmul.mubr.bf16.gmra.mxu0 %v377
      %v448 = vpop.f32.mrf.mxu0
      %v449 = vadd.f32 0.0, %v448
      %v450 = vpop.f32.mrf.mxu0
      %v451 = vadd.f32 0.0, %v450
      %v452 = vpop.f32.mrf.mxu0
      %v453 = vadd.f32 0.0, %v452
      %v454 = vpop.f32.mrf.mxu0
      %v455 = vadd.f32 0.0, %v454
      %456 = vmatprep.mubr.bf16.mxu0 0
      %457 = vmatmul.mubr.bf16.gmra.mxu0 %v380
      %v458 = vpop.f32.mrf.mxu0
      %v459 = vadd.f32 0.0, %v458
      %v460 = vpop.f32.mrf.mxu0
      %v461 = vadd.f32 0.0, %v460
      %v462 = vpop.f32.mrf.mxu0
      %v463 = vadd.f32 0.0, %v462
      %v464 = vpop.f32.mrf.mxu0
      %v465 = vadd.f32 0.0, %v464
      %466 = vmatprep.mubr.bf16.mxu0 0
      %467 = vmatmul.mubr.bf16.gmra.mxu0 %v383
      %v468 = vpop.f32.mrf.mxu0
      %v469 = vadd.f32 0.0, %v468
      %v470 = vpop.f32.mrf.mxu0
      %v471 = vadd.f32 0.0, %v470
      %v472 = vpop.f32.mrf.mxu0
      %v473 = vadd.f32 0.0, %v472
      %v474 = vpop.f32.mrf.mxu0
      %v475 = vadd.f32 0.0, %v474
      %476 = vmatprep.mubr.bf16.mxu0 0
      %477 = vmatmul.mubr.bf16.gmra.mxu0 %v386
      %v478 = vpop.f32.mrf.mxu0
      %v479 = vadd.f32 0.0, %v478
      %v480 = vpop.f32.mrf.mxu0
      %v481 = vadd.f32 0.0, %v480
      %v482 = vpop.f32.mrf.mxu0
      %v483 = vadd.f32 0.0, %v482
      %v484 = vpop.f32.mrf.mxu0
      %v485 = vadd.f32 0.0, %v484
      %486 = vmatprep.mubr.bf16.mxu0 0
      %487 = vmatmul.mubr.bf16.gmra.mxu0 %v389
      %v488 = vpop.f32.mrf.mxu0
      %v489 = vadd.f32 0.0, %v488
      %v490 = vpop.f32.mrf.mxu0
      %v491 = vadd.f32 0.0, %v490
      %v492 = vpop.f32.mrf.mxu0
      %v493 = vadd.f32 0.0, %v492
      %v494 = vpop.f32.mrf.mxu0
      %v495 = vadd.f32 0.0, %v494
      %496 = vmatprep.mubr.bf16.mxu0 0
      %497 = vmatmul.mubr.bf16.gmra.mxu0 %v392
      %v498 = vpop.f32.mrf.mxu0
      %v499 = vadd.f32 0.0, %v498
      %v500 = vpop.f32.mrf.mxu0
      %v501 = vadd.f32 0.0, %v500
      %v502 = vpop.f32.mrf.mxu0
      %v503 = vadd.f32 0.0, %v502
      %v504 = vpop.f32.mrf.mxu0
      %v505 = vadd.f32 0.0, %v504
      %506 = vdwg.mxu0
      %v507 = vld [vmem:[%s250] sm:$0xff]
      %v508 = vld [vmem:[%s250 + $0x8] sm:$0xff]
      %v509 = vld [vmem:[%s250 + $0x10] sm:$0xff]
      %v510 = vld [vmem:[%s250 + $0x18] sm:$0xff]
      %v511 = vld [vmem:[%s250 + $0x20] sm:$0xff]
      %v512 = vld [vmem:[%s250 + $0x28] sm:$0xff]
      %v513 = vld [vmem:[%s250 + $0x30] sm:$0xff]
      %v514 = vld [vmem:[%s250 + $0x38] sm:$0xff]
      %v515 = vld [vmem:[%s250 + $0x40] sm:$0xff]
      %v516 = vld [vmem:[%s250 + $0x48] sm:$0xff]
      %v517 = vld [vmem:[%s250 + $0x50] sm:$0xff]
      %v518 = vld [vmem:[%s250 + $0x58] sm:$0xff]
      %v519 = vld [vmem:[%s250 + $0x60] sm:$0xff]
      %v520 = vld [vmem:[%s250 + $0x68] sm:$0xff]
      %v521 = vld [vmem:[%s250 + $0x70] sm:$0xff]
      %v522 = vld [vmem:[%s250 + $0x78] sm:$0xff]
      %v523 = vld [vmem:[%s2] sm:$0x3]
      %525 = vset.pattern.permute.xlu0 0
      %526 = vperm.xlu0 %525, %v507
      %v527 = vpop.permute.xlu0 %526
      %530 = vset.pattern.permute.xlu0 0
      %531 = vperm.xlu0 %530, %v508
      %v532 = vpop.permute.xlu0 %531
      %535 = vset.pattern.permute.xlu0 0
      %536 = vperm.xlu0 %535, %v509
      %v537 = vpop.permute.xlu0 %536
      %540 = vset.pattern.permute.xlu0 0
      %541 = vperm.xlu0 %540, %v510
      %v542 = vpop.permute.xlu0 %541
      %545 = vset.pattern.permute.xlu0 0
      %546 = vperm.xlu0 %545, %v511
      %v547 = vpop.permute.xlu0 %546
      %550 = vset.pattern.permute.xlu0 0
      %551 = vperm.xlu0 %550, %v512
      %v552 = vpop.permute.xlu0 %551
      %555 = vset.pattern.permute.xlu0 0
      %556 = vperm.xlu0 %555, %v513
      %v557 = vpop.permute.xlu0 %556
      %560 = vset.pattern.permute.xlu0 0
      %561 = vperm.xlu0 %560, %v514
      %v562 = vpop.permute.xlu0 %561
      %565 = vset.pattern.permute.xlu0 0
      %566 = vperm.xlu0 %565, %v515
      %v567 = vpop.permute.xlu0 %566
      %570 = vset.pattern.permute.xlu0 0
      %571 = vperm.xlu0 %570, %v516
      %v572 = vpop.permute.xlu0 %571
      %575 = vset.pattern.permute.xlu0 0
      %576 = vperm.xlu0 %575, %v517
      %v577 = vpop.permute.xlu0 %576
      %580 = vset.pattern.permute.xlu0 0
      %581 = vperm.xlu0 %580, %v518
      %v582 = vpop.permute.xlu0 %581
      %585 = vset.pattern.permute.xlu0 0
      %586 = vperm.xlu0 %585, %v519
      %v587 = vpop.permute.xlu0 %586
      %590 = vset.pattern.permute.xlu0 0
      %591 = vperm.xlu0 %590, %v520
      %v592 = vpop.permute.xlu0 %591
      %595 = vset.pattern.permute.xlu0 0
      %596 = vperm.xlu0 %595, %v521
      %v597 = vpop.permute.xlu0 %596
      %600 = vset.pattern.permute.xlu0 0
      %601 = vperm.xlu0 %600, %v522
      %v602 = vpop.permute.xlu0 %601
      %v605 = vlaneseq
      %v606 = vshrl.u32 %v605, 7
      %v607 = vsub.s32 0, %v606
      %v608 = vrot.slane %v523, %v607
      %v609 = vlaneseq
      %v610 = vshrl.u32 %v609, 7
      %v611 = vsub.s32 1, %v610
      %v612 = vrot.slane %v523, %v611
      %v615 = vadd.f32 %v527, %v608
      %v616 = vadd.f32 %v527, %v612
      %v617 = vadd.f32 %v532, %v608
      %v618 = vadd.f32 %v532, %v612
      %v619 = vadd.f32 %v537, %v608
      %v620 = vadd.f32 %v537, %v612
      %v621 = vadd.f32 %v542, %v608
      %v622 = vadd.f32 %v542, %v612
      %v623 = vadd.f32 %v547, %v608
      %v624 = vadd.f32 %v547, %v612
      %v625 = vadd.f32 %v552, %v608
      %v626 = vadd.f32 %v552, %v612
      %v627 = vadd.f32 %v557, %v608
      %v628 = vadd.f32 %v557, %v612
      %v629 = vadd.f32 %v562, %v608
      %v630 = vadd.f32 %v562, %v612
      %v631 = vadd.f32 %v567, %v608
      %v632 = vadd.f32 %v567, %v612
      %v633 = vadd.f32 %v572, %v608
      %v634 = vadd.f32 %v572, %v612
      %v635 = vadd.f32 %v577, %v608
      %v636 = vadd.f32 %v577, %v612
      %v637 = vadd.f32 %v582, %v608
      %v638 = vadd.f32 %v582, %v612
      %v639 = vadd.f32 %v587, %v608
      %v640 = vadd.f32 %v587, %v612
      %v641 = vadd.f32 %v592, %v608
      %v642 = vadd.f32 %v592, %v612
      %v643 = vadd.f32 %v597, %v608
      %v644 = vadd.f32 %v597, %v612
      %v645 = vadd.f32 %v602, %v608
      %v646 = vadd.f32 %v602, %v612
      %v647 = vmul.f32 %v429, 2.0
      %v648 = vmul.f32 %v431, 2.0
      %v649 = vmul.f32 %v433, 2.0
      %v650 = vmul.f32 %v435, 2.0
      %v651 = vmul.f32 %v439, 2.0
      %v652 = vmul.f32 %v441, 2.0
      %v653 = vmul.f32 %v443, 2.0
      %v654 = vmul.f32 %v445, 2.0
      %v655 = vmul.f32 %v449, 2.0
      %v656 = vmul.f32 %v451, 2.0
      %v657 = vmul.f32 %v453, 2.0
      %v658 = vmul.f32 %v455, 2.0
      %v659 = vmul.f32 %v459, 2.0
      %v660 = vmul.f32 %v461, 2.0
      %v661 = vmul.f32 %v463, 2.0
      %v662 = vmul.f32 %v465, 2.0
      %v663 = vmul.f32 %v469, 2.0
      %v664 = vmul.f32 %v471, 2.0
      %v665 = vmul.f32 %v473, 2.0
      %v666 = vmul.f32 %v475, 2.0
      %v667 = vmul.f32 %v479, 2.0
      %v668 = vmul.f32 %v481, 2.0
      %v669 = vmul.f32 %v483, 2.0
      %v670 = vmul.f32 %v485, 2.0
      %v671 = vmul.f32 %v489, 2.0
      %v672 = vmul.f32 %v491, 2.0
      %v673 = vmul.f32 %v493, 2.0
      %v674 = vmul.f32 %v495, 2.0
      %v675 = vmul.f32 %v499, 2.0
      %v676 = vmul.f32 %v501, 2.0
      %v677 = vmul.f32 %v503, 2.0
      %v678 = vmul.f32 %v505, 2.0
      %v679 = vsub.f32 %v615, %v647
      %v680 = vsub.f32 %v616, %v648
      %v681 = vsub.f32 %v617, %v649
      %v682 = vsub.f32 %v618, %v650
      %v683 = vsub.f32 %v619, %v651
      %v684 = vsub.f32 %v620, %v652
      %v685 = vsub.f32 %v621, %v653
      %v686 = vsub.f32 %v622, %v654
      %v687 = vsub.f32 %v623, %v655
      %v688 = vsub.f32 %v624, %v656
      %v689 = vsub.f32 %v625, %v657
      %v690 = vsub.f32 %v626, %v658
      %v691 = vsub.f32 %v627, %v659
      %v692 = vsub.f32 %v628, %v660
      %v693 = vsub.f32 %v629, %v661
      %v694 = vsub.f32 %v630, %v662
      %v695 = vsub.f32 %v631, %v663
      %v696 = vsub.f32 %v632, %v664
      %v697 = vsub.f32 %v633, %v665
      %v698 = vsub.f32 %v634, %v666
      %v699 = vsub.f32 %v635, %v667
      %v700 = vsub.f32 %v636, %v668
      %v701 = vsub.f32 %v637, %v669
      %v702 = vsub.f32 %v638, %v670
      %v703 = vsub.f32 %v639, %v671
      %v704 = vsub.f32 %v640, %v672
      %v705 = vsub.f32 %v641, %v673
      %v706 = vsub.f32 %v642, %v674
      %v707 = vsub.f32 %v643, %v675
      %v708 = vsub.f32 %v644, %v676
      %v709 = vsub.f32 %v645, %v677
      %v710 = vsub.f32 %v646, %v678
      %v711 = vmax.f32 %v679, 0.0
      %v712 = vmax.f32 %v680, 0.0
      %v713 = vmax.f32 %v681, 0.0
      %v714 = vmax.f32 %v682, 0.0
      %v715 = vmax.f32 %v683, 0.0
      %v716 = vmax.f32 %v684, 0.0
      %v717 = vmax.f32 %v685, 0.0
      %v718 = vmax.f32 %v686, 0.0
      %v719 = vmax.f32 %v687, 0.0
      %v720 = vmax.f32 %v688, 0.0
      %v721 = vmax.f32 %v689, 0.0
      %v722 = vmax.f32 %v690, 0.0
      %v723 = vmax.f32 %v691, 0.0
      %v724 = vmax.f32 %v692, 0.0
      %v725 = vmax.f32 %v693, 0.0
      %v726 = vmax.f32 %v694, 0.0
      %v727 = vmax.f32 %v695, 0.0
      %v728 = vmax.f32 %v696, 0.0
      %v729 = vmax.f32 %v697, 0.0
      %v730 = vmax.f32 %v698, 0.0
      %v731 = vmax.f32 %v699, 0.0
      %v732 = vmax.f32 %v700, 0.0
      %v733 = vmax.f32 %v701, 0.0
      %v734 = vmax.f32 %v702, 0.0
      %v735 = vmax.f32 %v703, 0.0
      %v736 = vmax.f32 %v704, 0.0
      %v737 = vmax.f32 %v705, 0.0
      %v738 = vmax.f32 %v706, 0.0
      %v739 = vmax.f32 %v707, 0.0
      %v740 = vmax.f32 %v708, 0.0
      %v741 = vmax.f32 %v709, 0.0
      %v742 = vmax.f32 %v710, 0.0
      %v743 = vmax.f32 %v711, %v712
      %744 = vmax.xlane.f32.xlu0 %v743
      %v745 = vpop.xlane.xlu0 %744
      %v746 = vmax.f32 %v713, %v714
      %747 = vmax.xlane.f32.xlu0 %v746
      %v748 = vpop.xlane.xlu0 %747
      %v749 = vmax.f32 %v715, %v716
      %750 = vmax.xlane.f32.xlu0 %v749
      %v751 = vpop.xlane.xlu0 %750
      %v752 = vmax.f32 %v717, %v718
      %753 = vmax.xlane.f32.xlu0 %v752
      %v754 = vpop.xlane.xlu0 %753
      %v755 = vmax.f32 %v719, %v720
      %756 = vmax.xlane.f32.xlu0 %v755
      %v757 = vpop.xlane.xlu0 %756
      %v758 = vmax.f32 %v721, %v722
      %759 = vmax.xlane.f32.xlu0 %v758
      %v760 = vpop.xlane.xlu0 %759
      %v761 = vmax.f32 %v723, %v724
      %762 = vmax.xlane.f32.xlu0 %v761
      %v763 = vpop.xlane.xlu0 %762
      %v764 = vmax.f32 %v725, %v726
      %765 = vmax.xlane.f32.xlu0 %v764
      %v766 = vpop.xlane.xlu0 %765
      %v767 = vmax.f32 %v727, %v728
      %768 = vmax.xlane.f32.xlu0 %v767
      %v769 = vpop.xlane.xlu0 %768
      %v770 = vmax.f32 %v729, %v730
      %771 = vmax.xlane.f32.xlu0 %v770
      %v772 = vpop.xlane.xlu0 %771
      %v773 = vmax.f32 %v731, %v732
      %774 = vmax.xlane.f32.xlu0 %v773
      %v775 = vpop.xlane.xlu0 %774
      %v776 = vmax.f32 %v733, %v734
      %777 = vmax.xlane.f32.xlu0 %v776
      %v778 = vpop.xlane.xlu0 %777
      %v779 = vmax.f32 %v735, %v736
      %780 = vmax.xlane.f32.xlu0 %v779
      %v781 = vpop.xlane.xlu0 %780
      %v782 = vmax.f32 %v737, %v738
      %783 = vmax.xlane.f32.xlu0 %v782
      %v784 = vpop.xlane.xlu0 %783
      %v785 = vmax.f32 %v739, %v740
      %786 = vmax.xlane.f32.xlu0 %v785
      %v787 = vpop.xlane.xlu0 %786
      %v788 = vmax.f32 %v741, %v742
      %789 = vmax.xlane.f32.xlu0 %v788
      %v790 = vpop.xlane.xlu0 %789
      %vm791 = vcmask 7168
      %792 = vst.msk [vmem:[%s262] sm:$0xff] %vm791, %v745
      %793 = vst.msk [vmem:[%s262 + $0x8] sm:$0xff] %vm791, %v748
      %794 = vst.msk [vmem:[%s262 + $0x10] sm:$0xff] %vm791, %v751
      %795 = vst.msk [vmem:[%s262 + $0x18] sm:$0xff] %vm791, %v754
      %796 = vst.msk [vmem:[%s262 + $0x20] sm:$0xff] %vm791, %v757
      %797 = vst.msk [vmem:[%s262 + $0x28] sm:$0xff] %vm791, %v760
      %798 = vst.msk [vmem:[%s262 + $0x30] sm:$0xff] %vm791, %v763
      %799 = vst.msk [vmem:[%s262 + $0x38] sm:$0xff] %vm791, %v766
      %800 = vst.msk [vmem:[%s262 + $0x40] sm:$0xff] %vm791, %v769
      %801 = vst.msk [vmem:[%s262 + $0x48] sm:$0xff] %vm791, %v772
      %802 = vst.msk [vmem:[%s262 + $0x50] sm:$0xff] %vm791, %v775
      %803 = vst.msk [vmem:[%s262 + $0x58] sm:$0xff] %vm791, %v778
      %804 = vst.msk [vmem:[%s262 + $0x60] sm:$0xff] %vm791, %v781
      %805 = vst.msk [vmem:[%s262 + $0x68] sm:$0xff] %vm791, %v784
      %806 = vst.msk [vmem:[%s262 + $0x70] sm:$0xff] %vm791, %v787
      %807 = vst.msk [vmem:[%s262 + $0x78] sm:$0xff] %vm791, %v790
      %v808 = vmin.f32 %v711, %v712
      %809 = vmin.xlane.f32.xlu0 %v808
      %v810 = vpop.xlane.xlu0 %809
      %v811 = vmin.f32 %v713, %v714
      %812 = vmin.xlane.f32.xlu0 %v811
      %v813 = vpop.xlane.xlu0 %812
      %v814 = vmin.f32 %v715, %v716
      %815 = vmin.xlane.f32.xlu0 %v814
      %v816 = vpop.xlane.xlu0 %815
      %v817 = vmin.f32 %v717, %v718
      %818 = vmin.xlane.f32.xlu0 %v817
      %v819 = vpop.xlane.xlu0 %818
      %v820 = vmin.f32 %v719, %v720
      %821 = vmin.xlane.f32.xlu0 %v820
      %v822 = vpop.xlane.xlu0 %821
      %v823 = vmin.f32 %v721, %v722
      %824 = vmin.xlane.f32.xlu0 %v823
      %v825 = vpop.xlane.xlu0 %824
      %v826 = vmin.f32 %v723, %v724
      %827 = vmin.xlane.f32.xlu0 %v826
      %v828 = vpop.xlane.xlu0 %827
      %v829 = vmin.f32 %v725, %v726
      %830 = vmin.xlane.f32.xlu0 %v829
      %v831 = vpop.xlane.xlu0 %830
      %v832 = vmin.f32 %v727, %v728
      %833 = vmin.xlane.f32.xlu0 %v832
      %v834 = vpop.xlane.xlu0 %833
      %v835 = vmin.f32 %v729, %v730
      %836 = vmin.xlane.f32.xlu0 %v835
      %v837 = vpop.xlane.xlu0 %836
      %v838 = vmin.f32 %v731, %v732
      %839 = vmin.xlane.f32.xlu0 %v838
      %v840 = vpop.xlane.xlu0 %839
      %v841 = vmin.f32 %v733, %v734
      %842 = vmin.xlane.f32.xlu0 %v841
      %v843 = vpop.xlane.xlu0 %842
      %v844 = vmin.f32 %v735, %v736
      %845 = vmin.xlane.f32.xlu0 %v844
      %v846 = vpop.xlane.xlu0 %845
      %v847 = vmin.f32 %v737, %v738
      %848 = vmin.xlane.f32.xlu0 %v847
      %v849 = vpop.xlane.xlu0 %848
      %v850 = vmin.f32 %v739, %v740
      %851 = vmin.xlane.f32.xlu0 %v850
      %v852 = vpop.xlane.xlu0 %851
      %v853 = vmin.f32 %v741, %v742
      %854 = vmin.xlane.f32.xlu0 %v853
      %v855 = vpop.xlane.xlu0 %854
      %v856 = vadd.f32 %v810, 0.0
      %v857 = vadd.f32 %v813, 0.0
      %v858 = vadd.f32 %v816, 0.0
      %v859 = vadd.f32 %v819, 0.0
      %v860 = vadd.f32 %v822, 0.0
      %v861 = vadd.f32 %v825, 0.0
      %v862 = vadd.f32 %v828, 0.0
      %v863 = vadd.f32 %v831, 0.0
      %v864 = vadd.f32 %v834, 0.0
      %v865 = vadd.f32 %v837, 0.0
      %v866 = vadd.f32 %v840, 0.0
      %v867 = vadd.f32 %v843, 0.0
      %v868 = vadd.f32 %v846, 0.0
      %v869 = vadd.f32 %v849, 0.0
      %v870 = vadd.f32 %v852, 0.0
      %v871 = vadd.f32 %v855, 0.0
      %vm872 = vcmp.le.f32.partialorder %v711, %v810
      %vm873 = vcmp.le.f32.partialorder %v712, %v810
      %vm874 = vcmp.le.f32.partialorder %v713, %v813
      %vm875 = vcmp.le.f32.partialorder %v714, %v813
      %vm876 = vcmp.le.f32.partialorder %v715, %v816
      %vm877 = vcmp.le.f32.partialorder %v716, %v816
      %vm878 = vcmp.le.f32.partialorder %v717, %v819
      %vm879 = vcmp.le.f32.partialorder %v718, %v819
      %vm880 = vcmp.le.f32.partialorder %v719, %v822
      %vm881 = vcmp.le.f32.partialorder %v720, %v822
      %vm882 = vcmp.le.f32.partialorder %v721, %v825
      %vm883 = vcmp.le.f32.partialorder %v722, %v825
      %vm884 = vcmp.le.f32.partialorder %v723, %v828
      %vm885 = vcmp.le.f32.partialorder %v724, %v828
      %vm886 = vcmp.le.f32.partialorder %v725, %v831
      %vm887 = vcmp.le.f32.partialorder %v726, %v831
      %vm888 = vcmp.le.f32.partialorder %v727, %v834
      %vm889 = vcmp.le.f32.partialorder %v728, %v834
      %vm890 = vcmp.le.f32.partialorder %v729, %v837
      %vm891 = vcmp.le.f32.partialorder %v730, %v837
      %vm892 = vcmp.le.f32.partialorder %v731, %v840
      %vm893 = vcmp.le.f32.partialorder %v732, %v840
      %vm894 = vcmp.le.f32.partialorder %v733, %v843
      %vm895 = vcmp.le.f32.partialorder %v734, %v843
      %vm896 = vcmp.le.f32.partialorder %v735, %v846
      %vm897 = vcmp.le.f32.partialorder %v736, %v846
      %vm898 = vcmp.le.f32.partialorder %v737, %v849
      %vm899 = vcmp.le.f32.partialorder %v738, %v849
      %vm900 = vcmp.le.f32.partialorder %v739, %v852
      %vm901 = vcmp.le.f32.partialorder %v740, %v852
      %vm902 = vcmp.le.f32.partialorder %v741, %v855
      %vm903 = vcmp.le.f32.partialorder %v742, %v855
      %v904 = vsel %vm872, 3e+38, %v711
      %v905 = vsel %vm873, 3e+38, %v712
      %v906 = vsel %vm874, 3e+38, %v713
      %v907 = vsel %vm875, 3e+38, %v714
      %v908 = vsel %vm876, 3e+38, %v715
      %v909 = vsel %vm877, 3e+38, %v716
      %v910 = vsel %vm878, 3e+38, %v717
      %v911 = vsel %vm879, 3e+38, %v718
      %v912 = vsel %vm880, 3e+38, %v719
      %v913 = vsel %vm881, 3e+38, %v720
      %v914 = vsel %vm882, 3e+38, %v721
      %v915 = vsel %vm883, 3e+38, %v722
      %v916 = vsel %vm884, 3e+38, %v723
      %v917 = vsel %vm885, 3e+38, %v724
      %v918 = vsel %vm886, 3e+38, %v725
      %v919 = vsel %vm887, 3e+38, %v726
      %v920 = vsel %vm888, 3e+38, %v727
      %v921 = vsel %vm889, 3e+38, %v728
      %v922 = vsel %vm890, 3e+38, %v729
      %v923 = vsel %vm891, 3e+38, %v730
      %v924 = vsel %vm892, 3e+38, %v731
      %v925 = vsel %vm893, 3e+38, %v732
      %v926 = vsel %vm894, 3e+38, %v733
      %v927 = vsel %vm895, 3e+38, %v734
      %v928 = vsel %vm896, 3e+38, %v735
      %v929 = vsel %vm897, 3e+38, %v736
      %v930 = vsel %vm898, 3e+38, %v737
      %v931 = vsel %vm899, 3e+38, %v738
      %v932 = vsel %vm900, 3e+38, %v739
      %v933 = vsel %vm901, 3e+38, %v740
      %v934 = vsel %vm902, 3e+38, %v741
      %v935 = vsel %vm903, 3e+38, %v742
      %v936 = vmin.f32 %v904, %v905
      %937 = vmin.xlane.f32.xlu0 %v936
      %v938 = vpop.xlane.xlu0 %937
      %v939 = vmin.f32 %v906, %v907
      %940 = vmin.xlane.f32.xlu0 %v939
      %v941 = vpop.xlane.xlu0 %940
      %v942 = vmin.f32 %v908, %v909
      %943 = vmin.xlane.f32.xlu0 %v942
      %v944 = vpop.xlane.xlu0 %943
      %v945 = vmin.f32 %v910, %v911
      %946 = vmin.xlane.f32.xlu0 %v945
      %v947 = vpop.xlane.xlu0 %946
      %v948 = vmin.f32 %v912, %v913
      %949 = vmin.xlane.f32.xlu0 %v948
      %v950 = vpop.xlane.xlu0 %949
      %v951 = vmin.f32 %v914, %v915
      %952 = vmin.xlane.f32.xlu0 %v951
      %v953 = vpop.xlane.xlu0 %952
      %v954 = vmin.f32 %v916, %v917
      %955 = vmin.xlane.f32.xlu0 %v954
      %v956 = vpop.xlane.xlu0 %955
      %v957 = vmin.f32 %v918, %v919
      %958 = vmin.xlane.f32.xlu0 %v957
      %v959 = vpop.xlane.xlu0 %958
      %v960 = vmin.f32 %v920, %v921
      %961 = vmin.xlane.f32.xlu0 %v960
      %v962 = vpop.xlane.xlu0 %961
      %v963 = vmin.f32 %v922, %v923
      %964 = vmin.xlane.f32.xlu0 %v963
      %v965 = vpop.xlane.xlu0 %964
      %v966 = vmin.f32 %v924, %v925
      %967 = vmin.xlane.f32.xlu0 %v966
      %v968 = vpop.xlane.xlu0 %967
      %v969 = vmin.f32 %v926, %v927
      %970 = vmin.xlane.f32.xlu0 %v969
      %v971 = vpop.xlane.xlu0 %970
      %v972 = vmin.f32 %v928, %v929
      %973 = vmin.xlane.f32.xlu0 %v972
      %v974 = vpop.xlane.xlu0 %973
      %v975 = vmin.f32 %v930, %v931
      %976 = vmin.xlane.f32.xlu0 %v975
      %v977 = vpop.xlane.xlu0 %976
      %v978 = vmin.f32 %v932, %v933
      %979 = vmin.xlane.f32.xlu0 %v978
      %v980 = vpop.xlane.xlu0 %979
      %v981 = vmin.f32 %v934, %v935
      %982 = vmin.xlane.f32.xlu0 %v981
      %v983 = vpop.xlane.xlu0 %982
      %v984 = vadd.f32 %v856, %v938
      %v985 = vadd.f32 %v857, %v941
      %v986 = vadd.f32 %v858, %v944
      %v987 = vadd.f32 %v859, %v947
      %v988 = vadd.f32 %v860, %v950
      %v989 = vadd.f32 %v861, %v953
      %v990 = vadd.f32 %v862, %v956
      %v991 = vadd.f32 %v863, %v959
      %v992 = vadd.f32 %v864, %v962
      %v993 = vadd.f32 %v865, %v965
      %v994 = vadd.f32 %v866, %v968
      %v995 = vadd.f32 %v867, %v971
      %v996 = vadd.f32 %v868, %v974
      %v997 = vadd.f32 %v869, %v977
      %v998 = vadd.f32 %v870, %v980
      %v999 = vadd.f32 %v871, %v983
      %vm1000 = vcmp.le.f32.partialorder %v904, %v938
      %vm1001 = vcmp.le.f32.partialorder %v905, %v938
      %vm1002 = vcmp.le.f32.partialorder %v906, %v941
      %vm1003 = vcmp.le.f32.partialorder %v907, %v941
      %vm1004 = vcmp.le.f32.partialorder %v908, %v944
      %vm1005 = vcmp.le.f32.partialorder %v909, %v944
      %vm1006 = vcmp.le.f32.partialorder %v910, %v947
      %vm1007 = vcmp.le.f32.partialorder %v911, %v947
      %vm1008 = vcmp.le.f32.partialorder %v912, %v950
      %vm1009 = vcmp.le.f32.partialorder %v913, %v950
      %vm1010 = vcmp.le.f32.partialorder %v914, %v953
      %vm1011 = vcmp.le.f32.partialorder %v915, %v953
      %vm1012 = vcmp.le.f32.partialorder %v916, %v956
      %vm1013 = vcmp.le.f32.partialorder %v917, %v956
      %vm1014 = vcmp.le.f32.partialorder %v918, %v959
      %vm1015 = vcmp.le.f32.partialorder %v919, %v959
      %vm1016 = vcmp.le.f32.partialorder %v920, %v962
      %vm1017 = vcmp.le.f32.partialorder %v921, %v962
      %vm1018 = vcmp.le.f32.partialorder %v922, %v965
      %vm1019 = vcmp.le.f32.partialorder %v923, %v965
      %vm1020 = vcmp.le.f32.partialorder %v924, %v968
      %vm1021 = vcmp.le.f32.partialorder %v925, %v968
      %vm1022 = vcmp.le.f32.partialorder %v926, %v971
      %vm1023 = vcmp.le.f32.partialorder %v927, %v971
      %vm1024 = vcmp.le.f32.partialorder %v928, %v974
      %vm1025 = vcmp.le.f32.partialorder %v929, %v974
      %vm1026 = vcmp.le.f32.partialorder %v930, %v977
      %vm1027 = vcmp.le.f32.partialorder %v931, %v977
      %vm1028 = vcmp.le.f32.partialorder %v932, %v980
      %vm1029 = vcmp.le.f32.partialorder %v933, %v980
      %vm1030 = vcmp.le.f32.partialorder %v934, %v983
      %vm1031 = vcmp.le.f32.partialorder %v935, %v983
      %v1032 = vsel %vm1000, 3e+38, %v904
      %v1033 = vsel %vm1001, 3e+38, %v905
      %v1034 = vsel %vm1002, 3e+38, %v906
      %v1035 = vsel %vm1003, 3e+38, %v907
      %v1036 = vsel %vm1004, 3e+38, %v908
      %v1037 = vsel %vm1005, 3e+38, %v909
      %v1038 = vsel %vm1006, 3e+38, %v910
      %v1039 = vsel %vm1007, 3e+38, %v911
      %v1040 = vsel %vm1008, 3e+38, %v912
      %v1041 = vsel %vm1009, 3e+38, %v913
      %v1042 = vsel %vm1010, 3e+38, %v914
      %v1043 = vsel %vm1011, 3e+38, %v915
      %v1044 = vsel %vm1012, 3e+38, %v916
      %v1045 = vsel %vm1013, 3e+38, %v917
      %v1046 = vsel %vm1014, 3e+38, %v918
      %v1047 = vsel %vm1015, 3e+38, %v919
      %v1048 = vsel %vm1016, 3e+38, %v920
      %v1049 = vsel %vm1017, 3e+38, %v921
      %v1050 = vsel %vm1018, 3e+38, %v922
      %v1051 = vsel %vm1019, 3e+38, %v923
      %v1052 = vsel %vm1020, 3e+38, %v924
      %v1053 = vsel %vm1021, 3e+38, %v925
      %v1054 = vsel %vm1022, 3e+38, %v926
      %v1055 = vsel %vm1023, 3e+38, %v927
      %v1056 = vsel %vm1024, 3e+38, %v928
      %v1057 = vsel %vm1025, 3e+38, %v929
      %v1058 = vsel %vm1026, 3e+38, %v930
      %v1059 = vsel %vm1027, 3e+38, %v931
      %v1060 = vsel %vm1028, 3e+38, %v932
      %v1061 = vsel %vm1029, 3e+38, %v933
      %v1062 = vsel %vm1030, 3e+38, %v934
      %v1063 = vsel %vm1031, 3e+38, %v935
      %v1064 = vmin.f32 %v1032, %v1033
      %1065 = vmin.xlane.f32.xlu0 %v1064
      %v1066 = vpop.xlane.xlu0 %1065
      %v1067 = vmin.f32 %v1034, %v1035
      %1068 = vmin.xlane.f32.xlu0 %v1067
      %v1069 = vpop.xlane.xlu0 %1068
      %v1070 = vmin.f32 %v1036, %v1037
      %1071 = vmin.xlane.f32.xlu0 %v1070
      %v1072 = vpop.xlane.xlu0 %1071
      %v1073 = vmin.f32 %v1038, %v1039
      %1074 = vmin.xlane.f32.xlu0 %v1073
      %v1075 = vpop.xlane.xlu0 %1074
      %v1076 = vmin.f32 %v1040, %v1041
      %1077 = vmin.xlane.f32.xlu0 %v1076
      %v1078 = vpop.xlane.xlu0 %1077
      %v1079 = vmin.f32 %v1042, %v1043
      %1080 = vmin.xlane.f32.xlu0 %v1079
      %v1081 = vpop.xlane.xlu0 %1080
      %v1082 = vmin.f32 %v1044, %v1045
      %1083 = vmin.xlane.f32.xlu0 %v1082
      %v1084 = vpop.xlane.xlu0 %1083
      %v1085 = vmin.f32 %v1046, %v1047
      %1086 = vmin.xlane.f32.xlu0 %v1085
      %v1087 = vpop.xlane.xlu0 %1086
      %v1088 = vmin.f32 %v1048, %v1049
      %1089 = vmin.xlane.f32.xlu0 %v1088
      %v1090 = vpop.xlane.xlu0 %1089
      %v1091 = vmin.f32 %v1050, %v1051
      %1092 = vmin.xlane.f32.xlu0 %v1091
      %v1093 = vpop.xlane.xlu0 %1092
      %v1094 = vmin.f32 %v1052, %v1053
      %1095 = vmin.xlane.f32.xlu0 %v1094
      %v1096 = vpop.xlane.xlu0 %1095
      %v1097 = vmin.f32 %v1054, %v1055
      %1098 = vmin.xlane.f32.xlu0 %v1097
      %v1099 = vpop.xlane.xlu0 %1098
      %v1100 = vmin.f32 %v1056, %v1057
      %1101 = vmin.xlane.f32.xlu0 %v1100
      %v1102 = vpop.xlane.xlu0 %1101
      %v1103 = vmin.f32 %v1058, %v1059
      %1104 = vmin.xlane.f32.xlu0 %v1103
      %v1105 = vpop.xlane.xlu0 %1104
      %v1106 = vmin.f32 %v1060, %v1061
      %1107 = vmin.xlane.f32.xlu0 %v1106
      %v1108 = vpop.xlane.xlu0 %1107
      %v1109 = vmin.f32 %v1062, %v1063
      %1110 = vmin.xlane.f32.xlu0 %v1109
      %v1111 = vpop.xlane.xlu0 %1110
      %v1112 = vadd.f32 %v984, %v1066
      %v1113 = vadd.f32 %v985, %v1069
      %v1114 = vadd.f32 %v986, %v1072
      %v1115 = vadd.f32 %v987, %v1075
      %v1116 = vadd.f32 %v988, %v1078
      %v1117 = vadd.f32 %v989, %v1081
      %v1118 = vadd.f32 %v990, %v1084
      %v1119 = vadd.f32 %v991, %v1087
      %v1120 = vadd.f32 %v992, %v1090
      %v1121 = vadd.f32 %v993, %v1093
      %v1122 = vadd.f32 %v994, %v1096
      %v1123 = vadd.f32 %v995, %v1099
      %v1124 = vadd.f32 %v996, %v1102
      %v1125 = vadd.f32 %v997, %v1105
      %v1126 = vadd.f32 %v998, %v1108
      %v1127 = vadd.f32 %v999, %v1111
      %vm1128 = vcmp.le.f32.partialorder %v1032, %v1066
      %vm1129 = vcmp.le.f32.partialorder %v1033, %v1066
      %vm1130 = vcmp.le.f32.partialorder %v1034, %v1069
      %vm1131 = vcmp.le.f32.partialorder %v1035, %v1069
      %vm1132 = vcmp.le.f32.partialorder %v1036, %v1072
      %vm1133 = vcmp.le.f32.partialorder %v1037, %v1072
      %vm1134 = vcmp.le.f32.partialorder %v1038, %v1075
      %vm1135 = vcmp.le.f32.partialorder %v1039, %v1075
      %vm1136 = vcmp.le.f32.partialorder %v1040, %v1078
      %vm1137 = vcmp.le.f32.partialorder %v1041, %v1078
      %vm1138 = vcmp.le.f32.partialorder %v1042, %v1081
      %vm1139 = vcmp.le.f32.partialorder %v1043, %v1081
      %vm1140 = vcmp.le.f32.partialorder %v1044, %v1084
      %vm1141 = vcmp.le.f32.partialorder %v1045, %v1084
      %vm1142 = vcmp.le.f32.partialorder %v1046, %v1087
      %vm1143 = vcmp.le.f32.partialorder %v1047, %v1087
      %vm1144 = vcmp.le.f32.partialorder %v1048, %v1090
      %vm1145 = vcmp.le.f32.partialorder %v1049, %v1090
      %vm1146 = vcmp.le.f32.partialorder %v1050, %v1093
      %vm1147 = vcmp.le.f32.partialorder %v1051, %v1093
      %vm1148 = vcmp.le.f32.partialorder %v1052, %v1096
      %vm1149 = vcmp.le.f32.partialorder %v1053, %v1096
      %vm1150 = vcmp.le.f32.partialorder %v1054, %v1099
      %vm1151 = vcmp.le.f32.partialorder %v1055, %v1099
      %vm1152 = vcmp.le.f32.partialorder %v1056, %v1102
      %vm1153 = vcmp.le.f32.partialorder %v1057, %v1102
      %vm1154 = vcmp.le.f32.partialorder %v1058, %v1105
      %vm1155 = vcmp.le.f32.partialorder %v1059, %v1105
      %vm1156 = vcmp.le.f32.partialorder %v1060, %v1108
      %vm1157 = vcmp.le.f32.partialorder %v1061, %v1108
      %vm1158 = vcmp.le.f32.partialorder %v1062, %v1111
      %vm1159 = vcmp.le.f32.partialorder %v1063, %v1111
      %v1160 = vsel %vm1128, 3e+38, %v1032
      %v1161 = vsel %vm1129, 3e+38, %v1033
      %v1162 = vsel %vm1130, 3e+38, %v1034
      %v1163 = vsel %vm1131, 3e+38, %v1035
      %v1164 = vsel %vm1132, 3e+38, %v1036
      %v1165 = vsel %vm1133, 3e+38, %v1037
      %v1166 = vsel %vm1134, 3e+38, %v1038
      %v1167 = vsel %vm1135, 3e+38, %v1039
      %v1168 = vsel %vm1136, 3e+38, %v1040
      %v1169 = vsel %vm1137, 3e+38, %v1041
      %v1170 = vsel %vm1138, 3e+38, %v1042
      %v1171 = vsel %vm1139, 3e+38, %v1043
      %v1172 = vsel %vm1140, 3e+38, %v1044
      %v1173 = vsel %vm1141, 3e+38, %v1045
      %v1174 = vsel %vm1142, 3e+38, %v1046
      %v1175 = vsel %vm1143, 3e+38, %v1047
      %v1176 = vsel %vm1144, 3e+38, %v1048
      %v1177 = vsel %vm1145, 3e+38, %v1049
      %v1178 = vsel %vm1146, 3e+38, %v1050
      %v1179 = vsel %vm1147, 3e+38, %v1051
      %v1180 = vsel %vm1148, 3e+38, %v1052
      %v1181 = vsel %vm1149, 3e+38, %v1053
      %v1182 = vsel %vm1150, 3e+38, %v1054
      %v1183 = vsel %vm1151, 3e+38, %v1055
      %v1184 = vsel %vm1152, 3e+38, %v1056
      %v1185 = vsel %vm1153, 3e+38, %v1057
      %v1186 = vsel %vm1154, 3e+38, %v1058
      %v1187 = vsel %vm1155, 3e+38, %v1059
      %v1188 = vsel %vm1156, 3e+38, %v1060
      %v1189 = vsel %vm1157, 3e+38, %v1061
      %v1190 = vsel %vm1158, 3e+38, %v1062
      %v1191 = vsel %vm1159, 3e+38, %v1063
      %v1192 = vmin.f32 %v1160, %v1161
      %1193 = vmin.xlane.f32.xlu0 %v1192
      %v1194 = vpop.xlane.xlu0 %1193
      %v1195 = vmin.f32 %v1162, %v1163
      %1196 = vmin.xlane.f32.xlu0 %v1195
      %v1197 = vpop.xlane.xlu0 %1196
      %v1198 = vmin.f32 %v1164, %v1165
      %1199 = vmin.xlane.f32.xlu0 %v1198
      %v1200 = vpop.xlane.xlu0 %1199
      %v1201 = vmin.f32 %v1166, %v1167
      %1202 = vmin.xlane.f32.xlu0 %v1201
      %v1203 = vpop.xlane.xlu0 %1202
      %v1204 = vmin.f32 %v1168, %v1169
      %1205 = vmin.xlane.f32.xlu0 %v1204
      %v1206 = vpop.xlane.xlu0 %1205
      %v1207 = vmin.f32 %v1170, %v1171
      %1208 = vmin.xlane.f32.xlu0 %v1207
      %v1209 = vpop.xlane.xlu0 %1208
      %v1210 = vmin.f32 %v1172, %v1173
      %1211 = vmin.xlane.f32.xlu0 %v1210
      %v1212 = vpop.xlane.xlu0 %1211
      %v1213 = vmin.f32 %v1174, %v1175
      %1214 = vmin.xlane.f32.xlu0 %v1213
      %v1215 = vpop.xlane.xlu0 %1214
      %v1216 = vmin.f32 %v1176, %v1177
      %1217 = vmin.xlane.f32.xlu0 %v1216
      %v1218 = vpop.xlane.xlu0 %1217
      %v1219 = vmin.f32 %v1178, %v1179
      %1220 = vmin.xlane.f32.xlu0 %v1219
      %v1221 = vpop.xlane.xlu0 %1220
      %v1222 = vmin.f32 %v1180, %v1181
      %1223 = vmin.xlane.f32.xlu0 %v1222
      %v1224 = vpop.xlane.xlu0 %1223
      %v1225 = vmin.f32 %v1182, %v1183
      %1226 = vmin.xlane.f32.xlu0 %v1225
      %v1227 = vpop.xlane.xlu0 %1226
      %v1228 = vmin.f32 %v1184, %v1185
      %1229 = vmin.xlane.f32.xlu0 %v1228
      %v1230 = vpop.xlane.xlu0 %1229
      %v1231 = vmin.f32 %v1186, %v1187
      %1232 = vmin.xlane.f32.xlu0 %v1231
      %v1233 = vpop.xlane.xlu0 %1232
      %v1234 = vmin.f32 %v1188, %v1189
      %1235 = vmin.xlane.f32.xlu0 %v1234
      %v1236 = vpop.xlane.xlu0 %1235
      %v1237 = vmin.f32 %v1190, %v1191
      %1238 = vmin.xlane.f32.xlu0 %v1237
      %v1239 = vpop.xlane.xlu0 %1238
      %v1240 = vadd.f32 %v1112, %v1194
      %v1241 = vadd.f32 %v1113, %v1197
      %v1242 = vadd.f32 %v1114, %v1200
      %v1243 = vadd.f32 %v1115, %v1203
      %v1244 = vadd.f32 %v1116, %v1206
      %v1245 = vadd.f32 %v1117, %v1209
      %v1246 = vadd.f32 %v1118, %v1212
      %v1247 = vadd.f32 %v1119, %v1215
      %v1248 = vadd.f32 %v1120, %v1218
      %v1249 = vadd.f32 %v1121, %v1221
      %v1250 = vadd.f32 %v1122, %v1224
      %v1251 = vadd.f32 %v1123, %v1227
      %v1252 = vadd.f32 %v1124, %v1230
      %v1253 = vadd.f32 %v1125, %v1233
      %v1254 = vadd.f32 %v1126, %v1236
      %v1255 = vadd.f32 %v1127, %v1239
      %vm1256 = vcmp.le.f32.partialorder %v1160, %v1194
      %vm1257 = vcmp.le.f32.partialorder %v1161, %v1194
      %vm1258 = vcmp.le.f32.partialorder %v1162, %v1197
      %vm1259 = vcmp.le.f32.partialorder %v1163, %v1197
      %vm1260 = vcmp.le.f32.partialorder %v1164, %v1200
      %vm1261 = vcmp.le.f32.partialorder %v1165, %v1200
      %vm1262 = vcmp.le.f32.partialorder %v1166, %v1203
      %vm1263 = vcmp.le.f32.partialorder %v1167, %v1203
      %vm1264 = vcmp.le.f32.partialorder %v1168, %v1206
      %vm1265 = vcmp.le.f32.partialorder %v1169, %v1206
      %vm1266 = vcmp.le.f32.partialorder %v1170, %v1209
      %vm1267 = vcmp.le.f32.partialorder %v1171, %v1209
      %vm1268 = vcmp.le.f32.partialorder %v1172, %v1212
      %vm1269 = vcmp.le.f32.partialorder %v1173, %v1212
      %vm1270 = vcmp.le.f32.partialorder %v1174, %v1215
      %vm1271 = vcmp.le.f32.partialorder %v1175, %v1215
      %vm1272 = vcmp.le.f32.partialorder %v1176, %v1218
      %vm1273 = vcmp.le.f32.partialorder %v1177, %v1218
      %vm1274 = vcmp.le.f32.partialorder %v1178, %v1221
      %vm1275 = vcmp.le.f32.partialorder %v1179, %v1221
      %vm1276 = vcmp.le.f32.partialorder %v1180, %v1224
      %vm1277 = vcmp.le.f32.partialorder %v1181, %v1224
      %vm1278 = vcmp.le.f32.partialorder %v1182, %v1227
      %vm1279 = vcmp.le.f32.partialorder %v1183, %v1227
      %vm1280 = vcmp.le.f32.partialorder %v1184, %v1230
      %vm1281 = vcmp.le.f32.partialorder %v1185, %v1230
      %vm1282 = vcmp.le.f32.partialorder %v1186, %v1233
      %vm1283 = vcmp.le.f32.partialorder %v1187, %v1233
      %vm1284 = vcmp.le.f32.partialorder %v1188, %v1236
      %vm1285 = vcmp.le.f32.partialorder %v1189, %v1236
      %vm1286 = vcmp.le.f32.partialorder %v1190, %v1239
      %vm1287 = vcmp.le.f32.partialorder %v1191, %v1239
      %v1288 = vsel %vm1256, 3e+38, %v1160
      %v1289 = vsel %vm1257, 3e+38, %v1161
      %v1290 = vsel %vm1258, 3e+38, %v1162
      %v1291 = vsel %vm1259, 3e+38, %v1163
      %v1292 = vsel %vm1260, 3e+38, %v1164
      %v1293 = vsel %vm1261, 3e+38, %v1165
      %v1294 = vsel %vm1262, 3e+38, %v1166
      %v1295 = vsel %vm1263, 3e+38, %v1167
      %v1296 = vsel %vm1264, 3e+38, %v1168
      %v1297 = vsel %vm1265, 3e+38, %v1169
      %v1298 = vsel %vm1266, 3e+38, %v1170
      %v1299 = vsel %vm1267, 3e+38, %v1171
      %v1300 = vsel %vm1268, 3e+38, %v1172
      %v1301 = vsel %vm1269, 3e+38, %v1173
      %v1302 = vsel %vm1270, 3e+38, %v1174
      %v1303 = vsel %vm1271, 3e+38, %v1175
      %v1304 = vsel %vm1272, 3e+38, %v1176
      %v1305 = vsel %vm1273, 3e+38, %v1177
      %v1306 = vsel %vm1274, 3e+38, %v1178
      %v1307 = vsel %vm1275, 3e+38, %v1179
      %v1308 = vsel %vm1276, 3e+38, %v1180
      %v1309 = vsel %vm1277, 3e+38, %v1181
      %v1310 = vsel %vm1278, 3e+38, %v1182
      %v1311 = vsel %vm1279, 3e+38, %v1183
      %v1312 = vsel %vm1280, 3e+38, %v1184
      %v1313 = vsel %vm1281, 3e+38, %v1185
      %v1314 = vsel %vm1282, 3e+38, %v1186
      %v1315 = vsel %vm1283, 3e+38, %v1187
      %v1316 = vsel %vm1284, 3e+38, %v1188
      %v1317 = vsel %vm1285, 3e+38, %v1189
      %v1318 = vsel %vm1286, 3e+38, %v1190
      %v1319 = vsel %vm1287, 3e+38, %v1191
      %v1320 = vmin.f32 %v1288, %v1289
      %1321 = vmin.xlane.f32.xlu0 %v1320
      %v1322 = vpop.xlane.xlu0 %1321
      %v1323 = vmin.f32 %v1290, %v1291
      %1324 = vmin.xlane.f32.xlu0 %v1323
      %v1325 = vpop.xlane.xlu0 %1324
      %v1326 = vmin.f32 %v1292, %v1293
      %1327 = vmin.xlane.f32.xlu0 %v1326
      %v1328 = vpop.xlane.xlu0 %1327
      %v1329 = vmin.f32 %v1294, %v1295
      %1330 = vmin.xlane.f32.xlu0 %v1329
      %v1331 = vpop.xlane.xlu0 %1330
      %v1332 = vmin.f32 %v1296, %v1297
      %1333 = vmin.xlane.f32.xlu0 %v1332
      %v1334 = vpop.xlane.xlu0 %1333
      %v1335 = vmin.f32 %v1298, %v1299
      %1336 = vmin.xlane.f32.xlu0 %v1335
      %v1337 = vpop.xlane.xlu0 %1336
      %v1338 = vmin.f32 %v1300, %v1301
      %1339 = vmin.xlane.f32.xlu0 %v1338
      %v1340 = vpop.xlane.xlu0 %1339
      %v1341 = vmin.f32 %v1302, %v1303
      %1342 = vmin.xlane.f32.xlu0 %v1341
      %v1343 = vpop.xlane.xlu0 %1342
      %v1344 = vmin.f32 %v1304, %v1305
      %1345 = vmin.xlane.f32.xlu0 %v1344
      %v1346 = vpop.xlane.xlu0 %1345
      %v1347 = vmin.f32 %v1306, %v1307
      %1348 = vmin.xlane.f32.xlu0 %v1347
      %v1349 = vpop.xlane.xlu0 %1348
      %v1350 = vmin.f32 %v1308, %v1309
      %1351 = vmin.xlane.f32.xlu0 %v1350
      %v1352 = vpop.xlane.xlu0 %1351
      %v1353 = vmin.f32 %v1310, %v1311
      %1354 = vmin.xlane.f32.xlu0 %v1353
      %v1355 = vpop.xlane.xlu0 %1354
      %v1356 = vmin.f32 %v1312, %v1313
      %1357 = vmin.xlane.f32.xlu0 %v1356
      %v1358 = vpop.xlane.xlu0 %1357
      %v1359 = vmin.f32 %v1314, %v1315
      %1360 = vmin.xlane.f32.xlu0 %v1359
      %v1361 = vpop.xlane.xlu0 %1360
      %v1362 = vmin.f32 %v1316, %v1317
      %1363 = vmin.xlane.f32.xlu0 %v1362
      %v1364 = vpop.xlane.xlu0 %1363
      %v1365 = vmin.f32 %v1318, %v1319
      %1366 = vmin.xlane.f32.xlu0 %v1365
      %v1367 = vpop.xlane.xlu0 %1366
      %v1368 = vadd.f32 %v1240, %v1322
      %v1369 = vadd.f32 %v1241, %v1325
      %v1370 = vadd.f32 %v1242, %v1328
      %v1371 = vadd.f32 %v1243, %v1331
      %v1372 = vadd.f32 %v1244, %v1334
      %v1373 = vadd.f32 %v1245, %v1337
      %v1374 = vadd.f32 %v1246, %v1340
      %v1375 = vadd.f32 %v1247, %v1343
      %v1376 = vadd.f32 %v1248, %v1346
      %v1377 = vadd.f32 %v1249, %v1349
      %v1378 = vadd.f32 %v1250, %v1352
      %v1379 = vadd.f32 %v1251, %v1355
      %v1380 = vadd.f32 %v1252, %v1358
      %v1381 = vadd.f32 %v1253, %v1361
      %v1382 = vadd.f32 %v1254, %v1364
      %v1383 = vadd.f32 %v1255, %v1367
      %v1384 = vmul.f32 %v1368, -0.003125
      %v1385 = vmul.f32 %v1369, -0.003125
      %v1386 = vmul.f32 %v1370, -0.003125
      %v1387 = vmul.f32 %v1371, -0.003125
      %v1388 = vmul.f32 %v1372, -0.003125
      %v1389 = vmul.f32 %v1373, -0.003125
      %v1390 = vmul.f32 %v1374, -0.003125
      %v1391 = vmul.f32 %v1375, -0.003125
      %v1392 = vmul.f32 %v1376, -0.003125
      %v1393 = vmul.f32 %v1377, -0.003125
      %v1394 = vmul.f32 %v1378, -0.003125
      %v1395 = vmul.f32 %v1379, -0.003125
      %v1396 = vmul.f32 %v1380, -0.003125
      %v1397 = vmul.f32 %v1381, -0.003125
      %v1398 = vmul.f32 %v1382, -0.003125
      %v1399 = vmul.f32 %v1383, -0.003125
      %v1400 = vmul.f32 %v1384, 1.442695
      %v1401 = vpow.pop %v1400
      %v1402 = vmul.f32 %v1385, 1.442695
      %v1403 = vpow.pop %v1402
      %v1404 = vmul.f32 %v1386, 1.442695
      %v1405 = vpow.pop %v1404
      %v1406 = vmul.f32 %v1387, 1.442695
      %v1407 = vpow.pop %v1406
      %v1408 = vmul.f32 %v1388, 1.442695
      %v1409 = vpow.pop %v1408
      %v1410 = vmul.f32 %v1389, 1.442695
      %v1411 = vpow.pop %v1410
      %v1412 = vmul.f32 %v1390, 1.442695
      %v1413 = vpow.pop %v1412
      %v1414 = vmul.f32 %v1391, 1.442695
      %v1415 = vpow.pop %v1414
      %v1416 = vmul.f32 %v1392, 1.442695
      %v1417 = vpow.pop %v1416
      %v1418 = vmul.f32 %v1393, 1.442695
      %v1419 = vpow.pop %v1418
      %v1420 = vmul.f32 %v1394, 1.442695
      %v1421 = vpow.pop %v1420
      %v1422 = vmul.f32 %v1395, 1.442695
      %v1423 = vpow.pop %v1422
      %v1424 = vmul.f32 %v1396, 1.442695
      %v1425 = vpow.pop %v1424
      %v1426 = vmul.f32 %v1397, 1.442695
      %v1427 = vpow.pop %v1426
      %v1428 = vmul.f32 %v1398, 1.442695
      %v1429 = vpow.pop %v1428
      %v1430 = vmul.f32 %v1399, 1.442695
      %v1431 = vpow.pop %v1430
      %1432 = vst.msk [vmem:[%s256] sm:$0xff] %vm791, %v1401
      %1433 = vst.msk [vmem:[%s256 + $0x8] sm:$0xff] %vm791, %v1403
      %1434 = vst.msk [vmem:[%s256 + $0x10] sm:$0xff] %vm791, %v1405
      %1435 = vst.msk [vmem:[%s256 + $0x18] sm:$0xff] %vm791, %v1407
      %1436 = vst.msk [vmem:[%s256 + $0x20] sm:$0xff] %vm791, %v1409
      %1437 = vst.msk [vmem:[%s256 + $0x28] sm:$0xff] %vm791, %v1411
      %1438 = vst.msk [vmem:[%s256 + $0x30] sm:$0xff] %vm791, %v1413
      %1439 = vst.msk [vmem:[%s256 + $0x38] sm:$0xff] %vm791, %v1415
      %1440 = vst.msk [vmem:[%s256 + $0x40] sm:$0xff] %vm791, %v1417
      %1441 = vst.msk [vmem:[%s256 + $0x48] sm:$0xff] %vm791, %v1419
      %1442 = vst.msk [vmem:[%s256 + $0x50] sm:$0xff] %vm791, %v1421
      %1443 = vst.msk [vmem:[%s256 + $0x58] sm:$0xff] %vm791, %v1423
      %1444 = vst.msk [vmem:[%s256 + $0x60] sm:$0xff] %vm791, %v1425
      %1445 = vst.msk [vmem:[%s256 + $0x68] sm:$0xff] %vm791, %v1427
      %1446 = vst.msk [vmem:[%s256 + $0x70] sm:$0xff] %vm791, %v1429
      %1447 = vst.msk [vmem:[%s256 + $0x78] sm:$0xff] %vm791, %v1431
      %s1448 = smul.u32 16, %s17
      %p1449 = scmp.lt.s32.totalorder %s1448, 31
      %s1450 = scalar_select %p1449, %s1448, 31
      %s1451 = smul.addr %s1450, 8
      %s1452 = scalar_lea.vmem %s4, %s1451
      %s1453 = smul.u32 16, %s17
      %p1454 = scmp.lt.s32.totalorder %s1453, 31
      %s1455 = scalar_select %p1454, %s1453, 31
      %s1456 = smul.addr %s1455, 8
      %s1457 = scalar_lea.vmem %s5, %s1456
      // Predicated region
      $region37: #{_fastv_cluster_jit.2} parent=35 // pred_check
        %p1458 = pneg %p129
      $region38: #{_fastv_cluster_jit.2} parent=35 // pred_check_branch
        %1460 = sbr.rel (%p1458) target = $region40
      $region39: #{_fastv_cluster_jit.2} parent=35 // pred_region
        %s1461 = smul.u32 16, %s17
      $region40: #{_fastv_cluster_jit.2} parent=35 // pred_fallthru
        _
      // Predicated region
      $region41: #{_fastv_cluster_jit.2} parent=35 // pred_check
        %p1462 = pneg %p155
      $region42: #{_fastv_cluster_jit.2} parent=35 // pred_check_branch
        %1464 = sbr.rel (%p1462) target = $region44
      $region43: #{_fastv_cluster_jit.2} parent=35 // pred_region
        %s1465 = smul.u32 16, %s17
      $region44: #{_fastv_cluster_jit.2} parent=35 // pred_fallthru
        _
    $region36: #{_fastv_cluster_jit.2} parent=5 // pred_fallthru
      _
    %p1466 = scmp.le.s32.totalorder 2, %s12
    // Predicated region
    $region45: #{_fastv_cluster_jit.2} parent=5 // pred_check
      %p1467 = pneg %p1466
    $region46: #{_fastv_cluster_jit.2} parent=5 // pred_check_branch
      %1469 = sbr.rel (%p1467) target = $region48
    $region47: #{_fastv_cluster_jit.2} parent=5 // pred_region
      %s1470 = ssub.s32 %s12, 2
      // Predicated region
      $region49: #{_fastv_cluster_jit.2} parent=47 // pred_check
        %p1471 = pneg %p135
      $region50: #{_fastv_cluster_jit.2} parent=47 // pred_check_branch
        %1473 = sbr.rel (%p1471) target = $region52
      $region51: #{_fastv_cluster_jit.2} parent=47 // pred_region
        %s1474 = smul.u32 16, %s18
        %p1475 = scmp.lt.s32.totalorder %s1474, 31
        %s1476 = scalar_select %p1475, %s1474, 31
        %s1477 = smul.addr %s1476, 8
        %s1478 = scalar_lea.vmem %s4, %s1477
      $region52: #{_fastv_cluster_jit.2} parent=47 // pred_fallthru
        _
      // Predicated region
      $region53: #{_fastv_cluster_jit.2} parent=47 // pred_check
        %p1479 = pneg %p161
      $region54: #{_fastv_cluster_jit.2} parent=47 // pred_check_branch
        %1481 = sbr.rel (%p1479) target = $region56
      $region55: #{_fastv_cluster_jit.2} parent=47 // pred_region
        %s1482 = smul.u32 16, %s18
        %p1483 = scmp.lt.s32.totalorder %s1482, 31
        %s1484 = scalar_select %p1483, %s1482, 31
        %s1485 = smul.addr %s1484, 8
        %s1486 = scalar_lea.vmem %s5, %s1485
      $region56: #{_fastv_cluster_jit.2} parent=47 // pred_fallthru
        _
    $region48: #{_fastv_cluster_jit.2} parent=5 // pred_fallthru
      _
  $region6: #{_fastv_cluster_jit.2} parent=0 // loop_footer
    %s16 = sadd.s32 1, %s12
  $region7: #{_fastv_cluster_jit.2} parent=0 // loop_footer_branch
    %11 = sbr.rel target = $region3
  $region8: #{_fastv_cluster_jit.2} parent=0 // loop_exit
    _

</llo_original>
